<compile_context>
chip_gen: v7x
topology: tpu7x:2x2x1
jax: 0.10.0
libtpu: 0.0.40
codegen_flags: <defaults>
</compile_context>

<pallas_src>
import functools

import jax
import jax.numpy as jnp
from jax.experimental import pallas as pl
from jax.experimental.pallas import tpu as pltpu


def _sigmoid(x):
    # Exact: sigmoid(x) == 0.5 * tanh(0.5 * x) + 0.5  (one EUP op vs exp + recip).
    return 0.5 * jnp.tanh(0.5 * x) + 0.5


def _lstm_kernel(x_ref, wih_ref, whh_ref, b_ref, h_out_ref,
                 h_scr, c_scr, xw_scr, *, t_chunk, hidden_size):
    """One (batch-tile, time-chunk) block of the LSTM recurrence.

    x_ref     : (t_chunk, Bt, D)   compute dtype — time-major input slice
    wih_ref   : (D, 4H)            compute dtype — loop invariant (VMEM resident)
    whh_ref   : (H, 4H)            compute dtype — loop invariant (VMEM resident)
    b_ref     : (1, 4H) f32        b_ih + b_hh
    h_out_ref : (t_chunk, Bt, H)   compute dtype
    h_scr/c_scr: (Bt, H) f32       recurrent carry across time chunks
    xw_scr    : (t_chunk, Bt, 4H) f32  per-chunk gate pre-activations (never in HBM)
    """
    H = hidden_size
    ci = pl.program_id(1)               # time-chunk index (innermost, "arbitrary")

    @pl.when(ci == 0)
    def _():
        h_scr[...] = jnp.zeros_like(h_scr)
        c_scr[...] = jnp.zeros_like(c_scr)

    wih = wih_ref[...]                  # hoisted, loop-invariant loads
    whh = whh_ref[...]
    bias = b_ref[...]                   # (1, 4H) f32

    # Fused input projection for the whole chunk.  No dependence on the recurrence,
    # so it is issued before the sequential loop; its MXU work hides in the slack of
    # the latency-bound h-chain.  Replaces the (T, B, 4H) f32 HBM intermediate.
    for t in range(t_chunk):            # static, fully unrolled
        xw_scr[t] = (jnp.dot(x_ref[t], wih, preferred_element_type=jnp.float32)
                     + bias)

    def step(t, carry):
        h, c = carry                                              # (Bt, H) f32
        # Only the h-dependent matmul remains on the serial critical path.
        gates = xw_scr[t] + jnp.dot(h.astype(whh.dtype), whh,
                                    preferred_element_type=jnp.float32)
        # PyTorch gate order: i, f, g, o.  Gate math stays f32 (VPU/EUP).
        # NOTE: at large b_tile, consider consuming `gates` slice-by-slice if the
        # bundle dump shows vreg spills saturating vld/vst slots.
        i_g = _sigmoid(gates[:, 0 * H:1 * H])
        f_g = _sigmoid(gates[:, 1 * H:2 * H])
        g_g = jnp.tanh(gates[:, 2 * H:3 * H])
        o_g = _sigmoid(gates[:, 3 * H:4 * H])
        c_new = f_g * c + i_g * g_g
        h_new = o_g * jnp.tanh(c_new)
        h_out_ref[t] = h_new.astype(h_out_ref.dtype)
        return (h_new, c_new)

    # Always unrolled: a rolled short inner loop hides the body from the scheduler.
    h_fin, c_fin = jax.lax.fori_loop(0, t_chunk, step,
                                     (h_scr[...], c_scr[...]), unroll=True)
    h_scr[...] = h_fin
    c_scr[...] = c_fin


def _num_tensorcores(on_tpu):
    if not on_tpu:
        return 1
    try:
        info = pltpu.get_tpu_info()
        for name in ("num_cores", "core_count", "num_tensorcores", "tensorcore_count"):
            v = getattr(info, name, None)
            if isinstance(v, int) and v > 0:
                return v
    except Exception:
        pass
    return 1


def _vmem_capacity_bytes(on_tpu):
    if on_tpu:
        try:
            v = int(pltpu.get_tpu_info().vmem_capacity_bytes)
            if v > 0:
                return v
        except Exception:
            pass
    # Conservative default (v7x per-core VMEM); v5e/v6e have 128 MiB.
    return 64 * 1024 * 1024


def _pick_time_chunk(T, b_tile, D, H, itemsize, budget, weights_single, max_chunk=32):
    """Largest time chunk (<= max_chunk) whose VMEM footprint fits the budget,
    preferring chunks that minimize padded total steps."""
    w_buf = 1 if weights_single else 2
    fixed = w_buf * (D * 4 * H + H * 4 * H) * itemsize      # W_ih + W_hh
    fixed += 2 * (4 * H) * 4                                # bias (f32)
    fixed += 2 * b_tile * H * 4                             # h/c carry scratch (f32)
    best_c, best_key, best_bytes = 1, None, 0
    for c in range(1, min(T, max_chunk) + 1):
        per = (2 * c * b_tile * D * itemsize                # x block (double-buffered)
               + 2 * c * b_tile * H * itemsize              # h-out block (double-buffered)
               + c * b_tile * 4 * H * 4)                    # xw scratch (f32)
        total = fixed + per
        if c > 1 and total > budget:
            continue
        key = (-(-T // c) * c, -c)                          # (padded steps, prefer larger c)
        if best_key is None or key < best_key:
            best_c, best_key, best_bytes = c, key, total
    return best_c, best_bytes


def lstm_classifier_forward(x, params, *, compute_dtype=None):
    """x: [B, T, D] float32 (batch_first).  Returns (loss=None, logits [B, T, C])."""
    wih_t, whh_t, b, wfc_t, bfc = params
    B, T, D = x.shape
    H = whh_t.shape[0]

    on_tpu = jax.default_backend() == "tpu"
    # bf16 MXU operands on TPU; f32 elsewhere (XLA:CPU cannot do bf16xbf16->f32 dots).
    cdt = (jnp.bfloat16 if on_tpu else jnp.float32) if compute_dtype is None else compute_dtype
    itemsize = jnp.dtype(cdt).itemsize

    # Batch tiling: only split across TensorCores when there are >=2 of them and
    # each half still feeds the MXU reasonably (>= 64 rows).  Never split on v5e/v6e.
    n_tc = _num_tensorcores(on_tpu)
    b_tile = B // 2 if (n_tc >= 2 and B % 2 == 0 and (B // 2) >= 64) else B
    num_bt = B // b_tile

    # Time chunking against a per-generation VMEM budget; explicit vmem_limit_bytes.
    cap = _vmem_capacity_bytes(on_tpu)
    budget = int(0.70 * cap)
    weights_single = on_tpu            # pl.Buffered(1) only under real TPU lowering
    t_chunk, est_bytes = _pick_time_chunk(T, b_tile, D, H, itemsize, budget,
                                          weights_single)
    num_tchunks = -(-T // t_chunk)
    T_pad = num_tchunks * t_chunk
    vmem_limit = min(cap, max(32 * 1024 * 1024, int(1.5 * est_bytes)))

    # Time-major input (cheap vs the removed (T,B,4H) f32 intermediate); pad tail.
    x_tm = jnp.transpose(x, (1, 0, 2)).astype(cdt)          # (T, B, D)
    if T_pad != T:
        x_tm = jnp.pad(x_tm, ((0, T_pad - T), (0, 0), (0, 0)))

    def _const_spec(shape):
        # Loop-invariant weights: constant block index -> DMA'd once; single-buffer
        # on real TPU to save VMEM (headroom matters on v7x 64 MiB / v5e scoped 16 MiB).
        if weights_single:
            return pl.BlockSpec(shape, lambda bi, ci: (0, 0),
                                pipeline_mode=pl.Buffered(1))
        return pl.BlockSpec(shape, lambda bi, ci: (0, 0))

    kernel = functools.partial(_lstm_kernel, t_chunk=t_chunk, hidden_size=H)

    h_tm = pl.pallas_call(
        kernel,
        out_shape=jax.ShapeDtypeStruct((T_pad, B, H), cdt),
        grid_spec=pltpu.PrefetchScalarGridSpec(
            num_scalar_prefetch=0,
            grid=(num_bt, num_tchunks),          # time axis innermost ("arbitrary")
            in_specs=[
                pl.BlockSpec((t_chunk, b_tile, D), lambda bi, ci: (ci, bi, 0)),
                _const_spec((D, 4 * H)),         # W_ih
                _const_spec((H, 4 * H)),         # W_hh
                pl.BlockSpec((1, 4 * H), lambda bi, ci: (0, 0)),   # bias (f32)
            ],
            out_specs=pl.BlockSpec((t_chunk, b_tile, H), lambda bi, ci: (ci, bi, 0)),
            scratch_shapes=[
                pltpu.VMEM((b_tile, H), jnp.float32),              # h carry
                pltpu.VMEM((b_tile, H), jnp.float32),              # c carry
                pltpu.VMEM((t_chunk, b_tile, 4 * H), jnp.float32), # gate pre-acts
            ],
        ),
        compiler_params=pltpu.CompilerParams(
            dimension_semantics=("parallel", "arbitrary"),
            vmem_limit_bytes=vmem_limit,
        ),
    )(x_tm, wih_t.astype(cdt), whh_t.astype(cdt), b.astype(jnp.float32))

    h_tm = h_tm[:T]                                        # drop padded time steps

    # Hoisted fc head: one [T*B, H] x [H, C] lane-dense matmul; output goes straight
    # back to batch-first [B, T, C].
    logits = jnp.einsum("tbh,hc->btc", h_tm.astype(cdt), wfc_t.astype(cdt),
                        preferred_element_type=jnp.float32) + bfc
    return None, logits


def _reference_forward(x, params):
    """Pure-JAX f32 reference (lax.scan LSTM) matching PyTorch nn.LSTM semantics."""
    wih_t, whh_t, b, wfc_t, bfc = params
    B, T, D = x.shape
    H = whh_t.shape[0]

    def step(carry, x_t):
        h, c = carry
        gates = x_t @ wih_t + h @ whh_t + b[0]
        i = jax.nn.sigmoid(gates[:, 0 * H:1 * H])
        f = jax.nn.sigmoid(gates[:, 1 * H:2 * H])
        g = jnp.tanh(gates[:, 2 * H:3 * H])
        o = jax.nn.sigmoid(gates[:, 3 * H:4 * H])
        c_new = f * c + i * g
        h_new = o * jnp.tanh(c_new)
        return (h_new, c_new), h_new

    init = (jnp.zeros((B, H), jnp.float32), jnp.zeros((B, H), jnp.float32))
    _, hs = jax.lax.scan(step, init, jnp.transpose(x, (1, 0, 2)))
    out = jnp.transpose(hs, (1, 0, 2))            # [B, T, H]
    return out @ wfc_t + bfc[0]                   # [B, T, C]


if __name__ == "__main__":
    # Small shapes consistent with the module (input_size, hidden_size, classes
    # scaled down for a synthetic test).
    B, T, D, H, C = 2, 8, 32, 32, 16

    key = jax.random.PRNGKey(0)
    k = jax.random.split(key, 7)
    bound = 1.0 / (H ** 0.5)

    # PyTorch stores weight_ih:(4H,D), weight_hh:(4H,H); kernel uses transposes.
    w_ih = jax.random.uniform(k[0], (4 * H, D), jnp.float32, -bound, bound)
    w_hh = jax.random.uniform(k[1], (4 * H, H), jnp.float32, -bound, bound)
    b_ih = jax.random.uniform(k[2], (4 * H,), jnp.float32, -bound, bound)
    b_hh = jax.random.uniform(k[3], (4 * H,), jnp.float32, -bound, bound)
    w_fc = jax.random.uniform(k[4], (C, H), jnp.float32, -bound, bound)
    b_fc = jax.random.uniform(k[5], (C,), jnp.float32, -bound, bound)

    params = (
        jnp.transpose(w_ih),                     # [D, 4H]
        jnp.transpose(w_hh),                     # [H, 4H]
        (b_ih + b_hh).reshape(1, 4 * H),         # [1, 4H]
        jnp.transpose(w_fc),                     # [H, C]
        b_fc.reshape(1, C),                      # [1, C]
    )

    x = jax.random.normal(k[6], (B, T, D), jnp.float32)

    loss, logits = jax.jit(lstm_classifier_forward)(x, params)
    logits = jax.block_until_ready(logits)

    ref = _reference_forward(x, params)
    assert loss is None
    assert logits.shape == (B, T, C)
    # Tolerance covers bf16 MXU operands on TPU; off-TPU the compute is full f32.
    assert jnp.allclose(logits, ref, atol=5e-2, rtol=5e-2), "mismatch vs reference"

    # TODO(synk): cross_entropy loss branch (y is not None) is left in plain JAX
    # land; the module's default call path (y=None) returns loss=None.
    print("KERNEL_OK")
</pallas_src>

<mosaic_0001>
module attributes {stable_mosaic.version = 11 : i64} {
  func.func @_lstm_kernel(%arg0: i32, %arg1: i32, %arg2: memref<8x2x32xf32, #tpu.memory_space<vmem>>, %arg3: memref<32x128xf32, #tpu.memory_space<vmem>>, %arg4: memref<32x128xf32, #tpu.memory_space<vmem>>, %arg5: memref<1x128xf32, #tpu.memory_space<vmem>>, %arg6: memref<8x2x32xf32, #tpu.memory_space<vmem>>, %arg7: memref<2x32xf32, #tpu.memory_space<vmem>>, %arg8: memref<2x32xf32, #tpu.memory_space<vmem>>, %arg9: memref<8x2x128xf32, #tpu.memory_space<vmem>>) attributes {dimension_semantics = [#tpu.dimension_semantics<parallel>, #tpu.dimension_semantics<arbitrary>], iteration_bounds = array<i64: 1, 1>, scalar_prefetch = 0 : i64, scratch_operands = 3 : i64, tpu.core_type = #tpu.core_type<tc>, window_params = [{transform_indices = @transform_0, window_bounds = array<i64: 8, 2, 32>}, {pipeline_mode = #tpu.pipeline_mode<synchronous>, transform_indices = @transform_1, window_bounds = array<i64: 32, 128>}, {pipeline_mode = #tpu.pipeline_mode<synchronous>, transform_indices = @transform_2, window_bounds = array<i64: 32, 128>}, {pipeline_mode = #tpu.pipeline_mode<synchronous>, transform_indices = @transform_3, window_bounds = array<i64: 1, 128>}, {transform_indices = @transform_4, window_bounds = array<i64: 8, 2, 32>}]} {
    %c0_i32 = arith.constant 0 : i32
    %0 = arith.cmpi eq, %arg1, %c0_i32 : i32
    %1 = arith.extui %0 : i1 to i32
    %c0_i32_0 = arith.constant 0 : i32
    %2 = arith.cmpi ne, %1, %c0_i32_0 : i32
    scf.if %2 {
      %cst_175 = arith.constant 0.000000e+00 : f32
      %394 = vector.broadcast %cst_175 : f32 to vector<2x32xf32>
      %c0_176 = arith.constant 0 : index
      %c0_177 = arith.constant 0 : index
      %395 = vector.load %arg7[%c0_176, %c0_177] : memref<2x32xf32, #tpu.memory_space<vmem>>, vector<2x32xf32>
      tpu.vector_store %arg7[%c0_176, %c0_177], %394 {strides = array<i32>} : memref<2x32xf32, #tpu.memory_space<vmem>>, vector<2x32xf32>,
      %cst_178 = arith.constant 0.000000e+00 : f32
      %396 = vector.broadcast %cst_178 : f32 to vector<2x32xf32>
      %c0_179 = arith.constant 0 : index
      %c0_180 = arith.constant 0 : index
      %397 = vector.load %arg8[%c0_179, %c0_180] : memref<2x32xf32, #tpu.memory_space<vmem>>, vector<2x32xf32>
      tpu.vector_store %arg8[%c0_179, %c0_180], %396 {strides = array<i32>} : memref<2x32xf32, #tpu.memory_space<vmem>>, vector<2x32xf32>,
    } else {
    }
    %c0 = arith.constant 0 : index
    %c0_1 = arith.constant 0 : index
    %3 = vector.load %arg3[%c0, %c0_1] : memref<32x128xf32, #tpu.memory_space<vmem>>, vector<32x128xf32>
    %c0_2 = arith.constant 0 : index
    %c0_3 = arith.constant 0 : index
    %4 = vector.load %arg4[%c0_2, %c0_3] : memref<32x128xf32, #tpu.memory_space<vmem>>, vector<32x128xf32>
    %c0_4 = arith.constant 0 : index
    %c0_5 = arith.constant 0 : index
    %5 = vector.load %arg5[%c0_4, %c0_5] : memref<1x128xf32, #tpu.memory_space<vmem>>, vector<1x128xf32>
    %c0_6 = arith.constant 0 : index
    %c0_7 = arith.constant 0 : index
    %c0_8 = arith.constant 0 : index
    %6 = vector.load %arg2[%c0_6, %c0_7, %c0_8] : memref<8x2x32xf32, #tpu.memory_space<vmem>>, vector<1x2x32xf32>
    %7 = vector.shape_cast %6 : vector<1x2x32xf32> to vector<2x32xf32>
    %cst = arith.constant dense<0.000000e+00> : vector<2x128xf32>
    %8 = tpu.matmul %7, %3, %cst {dimension_numbers = #tpu.dot_dimension_numbers<[1], [0], [0], [1], [0, 0, 1, 1], [], []>} : vector<2x32xf32>, vector<32x128xf32>, vector<2x128xf32> -> vector<2x128xf32>
    %9 = vector.broadcast %5 : vector<1x128xf32> to vector<2x128xf32>
    %10 = arith.addf %8, %9 : vector<2x128xf32>
    %c0_9 = arith.constant 0 : index
    %c0_10 = arith.constant 0 : index
    %c0_11 = arith.constant 0 : index
    %11 = vector.load %arg9[%c0_9, %c0_10, %c0_11] : memref<8x2x128xf32, #tpu.memory_space<vmem>>, vector<1x2x128xf32>
    %12 = vector.shape_cast %11 : vector<1x2x128xf32> to vector<2x128xf32>
    %13 = vector.shape_cast %10 : vector<2x128xf32> to vector<1x2x128xf32>
    tpu.vector_store %arg9[%c0_9, %c0_10, %c0_11], %13 {strides = array<i32>} : memref<8x2x128xf32, #tpu.memory_space<vmem>>, vector<1x2x128xf32>,
    %c1 = arith.constant 1 : index
    %c0_12 = arith.constant 0 : index
    %c0_13 = arith.constant 0 : index
    %14 = vector.load %arg2[%c1, %c0_12, %c0_13] : memref<8x2x32xf32, #tpu.memory_space<vmem>>, vector<1x2x32xf32>
    %15 = vector.shape_cast %14 : vector<1x2x32xf32> to vector<2x32xf32>
    %cst_14 = arith.constant dense<0.000000e+00> : vector<2x128xf32>
    %16 = tpu.matmul %15, %3, %cst_14 {dimension_numbers = #tpu.dot_dimension_numbers<[1], [0], [0], [1], [0, 0, 1, 1], [], []>} : vector<2x32xf32>, vector<32x128xf32>, vector<2x128xf32> -> vector<2x128xf32>
    %17 = vector.broadcast %5 : vector<1x128xf32> to vector<2x128xf32>
    %18 = arith.addf %16, %17 : vector<2x128xf32>
    %c1_15 = arith.constant 1 : index
    %c0_16 = arith.constant 0 : index
    %c0_17 = arith.constant 0 : index
    %19 = vector.load %arg9[%c1_15, %c0_16, %c0_17] : memref<8x2x128xf32, #tpu.memory_space<vmem>>, vector<1x2x128xf32>
    %20 = vector.shape_cast %19 : vector<1x2x128xf32> to vector<2x128xf32>
    %21 = vector.shape_cast %18 : vector<2x128xf32> to vector<1x2x128xf32>
    tpu.vector_store %arg9[%c1_15, %c0_16, %c0_17], %21 {strides = array<i32>} : memref<8x2x128xf32, #tpu.memory_space<vmem>>, vector<1x2x128xf32>,
    %c2 = arith.constant 2 : index
    %c0_18 = arith.constant 0 : index
    %c0_19 = arith.constant 0 : index
    %22 = vector.load %arg2[%c2, %c0_18, %c0_19] : memref<8x2x32xf32, #tpu.memory_space<vmem>>, vector<1x2x32xf32>
    %23 = vector.shape_cast %22 : vector<1x2x32xf32> to vector<2x32xf32>
    %cst_20 = arith.constant dense<0.000000e+00> : vector<2x128xf32>
    %24 = tpu.matmul %23, %3, %cst_20 {dimension_numbers = #tpu.dot_dimension_numbers<[1], [0], [0], [1], [0, 0, 1, 1], [], []>} : vector<2x32xf32>, vector<32x128xf32>, vector<2x128xf32> -> vector<2x128xf32>
    %25 = vector.broadcast %5 : vector<1x128xf32> to vector<2x128xf32>
    %26 = arith.addf %24, %25 : vector<2x128xf32>
    %c2_21 = arith.constant 2 : index
    %c0_22 = arith.constant 0 : index
    %c0_23 = arith.constant 0 : index
    %27 = vector.load %arg9[%c2_21, %c0_22, %c0_23] : memref<8x2x128xf32, #tpu.memory_space<vmem>>, vector<1x2x128xf32>
    %28 = vector.shape_cast %27 : vector<1x2x128xf32> to vector<2x128xf32>
    %29 = vector.shape_cast %26 : vector<2x128xf32> to vector<1x2x128xf32>
    tpu.vector_store %arg9[%c2_21, %c0_22, %c0_23], %29 {strides = array<i32>} : memref<8x2x128xf32, #tpu.memory_space<vmem>>, vector<1x2x128xf32>,
    %c3 = arith.constant 3 : index
    %c0_24 = arith.constant 0 : index
    %c0_25 = arith.constant 0 : index
    %30 = vector.load %arg2[%c3, %c0_24, %c0_25] : memref<8x2x32xf32, #tpu.memory_space<vmem>>, vector<1x2x32xf32>
    %31 = vector.shape_cast %30 : vector<1x2x32xf32> to vector<2x32xf32>
    %cst_26 = arith.constant dense<0.000000e+00> : vector<2x128xf32>
    %32 = tpu.matmul %31, %3, %cst_26 {dimension_numbers = #tpu.dot_dimension_numbers<[1], [0], [0], [1], [0, 0, 1, 1], [], []>} : vector<2x32xf32>, vector<32x128xf32>, vector<2x128xf32> -> vector<2x128xf32>
    %33 = vector.broadcast %5 : vector<1x128xf32> to vector<2x128xf32>
    %34 = arith.addf %32, %33 : vector<2x128xf32>
    %c3_27 = arith.constant 3 : index
    %c0_28 = arith.constant 0 : index
    %c0_29 = arith.constant 0 : index
    %35 = vector.load %arg9[%c3_27, %c0_28, %c0_29] : memref<8x2x128xf32, #tpu.memory_space<vmem>>, vector<1x2x128xf32>
    %36 = vector.shape_cast %35 : vector<1x2x128xf32> to vector<2x128xf32>
    %37 = vector.shape_cast %34 : vector<2x128xf32> to vector<1x2x128xf32>
    tpu.vector_store %arg9[%c3_27, %c0_28, %c0_29], %37 {strides = array<i32>} : memref<8x2x128xf32, #tpu.memory_space<vmem>>, vector<1x2x128xf32>,
    %c4 = arith.constant 4 : index
    %c0_30 = arith.constant 0 : index
    %c0_31 = arith.constant 0 : index
    %38 = vector.load %arg2[%c4, %c0_30, %c0_31] : memref<8x2x32xf32, #tpu.memory_space<vmem>>, vector<1x2x32xf32>
    %39 = vector.shape_cast %38 : vector<1x2x32xf32> to vector<2x32xf32>
    %cst_32 = arith.constant dense<0.000000e+00> : vector<2x128xf32>
    %40 = tpu.matmul %39, %3, %cst_32 {dimension_numbers = #tpu.dot_dimension_numbers<[1], [0], [0], [1], [0, 0, 1, 1], [], []>} : vector<2x32xf32>, vector<32x128xf32>, vector<2x128xf32> -> vector<2x128xf32>
    %41 = vector.broadcast %5 : vector<1x128xf32> to vector<2x128xf32>
    %42 = arith.addf %40, %41 : vector<2x128xf32>
    %c4_33 = arith.constant 4 : index
    %c0_34 = arith.constant 0 : index
    %c0_35 = arith.constant 0 : index
    %43 = vector.load %arg9[%c4_33, %c0_34, %c0_35] : memref<8x2x128xf32, #tpu.memory_space<vmem>>, vector<1x2x128xf32>
    %44 = vector.shape_cast %43 : vector<1x2x128xf32> to vector<2x128xf32>
    %45 = vector.shape_cast %42 : vector<2x128xf32> to vector<1x2x128xf32>
    tpu.vector_store %arg9[%c4_33, %c0_34, %c0_35], %45 {strides = array<i32>} : memref<8x2x128xf32, #tpu.memory_space<vmem>>, vector<1x2x128xf32>,
    %c5 = arith.constant 5 : index
    %c0_36 = arith.constant 0 : index
    %c0_37 = arith.constant 0 : index
    %46 = vector.load %arg2[%c5, %c0_36, %c0_37] : memref<8x2x32xf32, #tpu.memory_space<vmem>>, vector<1x2x32xf32>
    %47 = vector.shape_cast %46 : vector<1x2x32xf32> to vector<2x32xf32>
    %cst_38 = arith.constant dense<0.000000e+00> : vector<2x128xf32>
    %48 = tpu.matmul %47, %3, %cst_38 {dimension_numbers = #tpu.dot_dimension_numbers<[1], [0], [0], [1], [0, 0, 1, 1], [], []>} : vector<2x32xf32>, vector<32x128xf32>, vector<2x128xf32> -> vector<2x128xf32>
    %49 = vector.broadcast %5 : vector<1x128xf32> to vector<2x128xf32>
    %50 = arith.addf %48, %49 : vector<2x128xf32>
    %c5_39 = arith.constant 5 : index
    %c0_40 = arith.constant 0 : index
    %c0_41 = arith.constant 0 : index
    %51 = vector.load %arg9[%c5_39, %c0_40, %c0_41] : memref<8x2x128xf32, #tpu.memory_space<vmem>>, vector<1x2x128xf32>
    %52 = vector.shape_cast %51 : vector<1x2x128xf32> to vector<2x128xf32>
    %53 = vector.shape_cast %50 : vector<2x128xf32> to vector<1x2x128xf32>
    tpu.vector_store %arg9[%c5_39, %c0_40, %c0_41], %53 {strides = array<i32>} : memref<8x2x128xf32, #tpu.memory_space<vmem>>, vector<1x2x128xf32>,
    %c6 = arith.constant 6 : index
    %c0_42 = arith.constant 0 : index
    %c0_43 = arith.constant 0 : index
    %54 = vector.load %arg2[%c6, %c0_42, %c0_43] : memref<8x2x32xf32, #tpu.memory_space<vmem>>, vector<1x2x32xf32>
    %55 = vector.shape_cast %54 : vector<1x2x32xf32> to vector<2x32xf32>
    %cst_44 = arith.constant dense<0.000000e+00> : vector<2x128xf32>
    %56 = tpu.matmul %55, %3, %cst_44 {dimension_numbers = #tpu.dot_dimension_numbers<[1], [0], [0], [1], [0, 0, 1, 1], [], []>} : vector<2x32xf32>, vector<32x128xf32>, vector<2x128xf32> -> vector<2x128xf32>
    %57 = vector.broadcast %5 : vector<1x128xf32> to vector<2x128xf32>
    %58 = arith.addf %56, %57 : vector<2x128xf32>
    %c6_45 = arith.constant 6 : index
    %c0_46 = arith.constant 0 : index
    %c0_47 = arith.constant 0 : index
    %59 = vector.load %arg9[%c6_45, %c0_46, %c0_47] : memref<8x2x128xf32, #tpu.memory_space<vmem>>, vector<1x2x128xf32>
    %60 = vector.shape_cast %59 : vector<1x2x128xf32> to vector<2x128xf32>
    %61 = vector.shape_cast %58 : vector<2x128xf32> to vector<1x2x128xf32>
    tpu.vector_store %arg9[%c6_45, %c0_46, %c0_47], %61 {strides = array<i32>} : memref<8x2x128xf32, #tpu.memory_space<vmem>>, vector<1x2x128xf32>,
    %c7 = arith.constant 7 : index
    %c0_48 = arith.constant 0 : index
    %c0_49 = arith.constant 0 : index
    %62 = vector.load %arg2[%c7, %c0_48, %c0_49] : memref<8x2x32xf32, #tpu.memory_space<vmem>>, vector<1x2x32xf32>
    %63 = vector.shape_cast %62 : vector<1x2x32xf32> to vector<2x32xf32>
    %cst_50 = arith.constant dense<0.000000e+00> : vector<2x128xf32>
    %64 = tpu.matmul %63, %3, %cst_50 {dimension_numbers = #tpu.dot_dimension_numbers<[1], [0], [0], [1], [0, 0, 1, 1], [], []>} : vector<2x32xf32>, vector<32x128xf32>, vector<2x128xf32> -> vector<2x128xf32>
    %65 = vector.broadcast %5 : vector<1x128xf32> to vector<2x128xf32>
    %66 = arith.addf %64, %65 : vector<2x128xf32>
    %c7_51 = arith.constant 7 : index
    %c0_52 = arith.constant 0 : index
    %c0_53 = arith.constant 0 : index
    %67 = vector.load %arg9[%c7_51, %c0_52, %c0_53] : memref<8x2x128xf32, #tpu.memory_space<vmem>>, vector<1x2x128xf32>
    %68 = vector.shape_cast %67 : vector<1x2x128xf32> to vector<2x128xf32>
    %69 = vector.shape_cast %66 : vector<2x128xf32> to vector<1x2x128xf32>
    tpu.vector_store %arg9[%c7_51, %c0_52, %c0_53], %69 {strides = array<i32>} : memref<8x2x128xf32, #tpu.memory_space<vmem>>, vector<1x2x128xf32>,
    %c0_54 = arith.constant 0 : index
    %c0_55 = arith.constant 0 : index
    %70 = vector.load %arg7[%c0_54, %c0_55] : memref<2x32xf32, #tpu.memory_space<vmem>>, vector<2x32xf32>
    %c0_56 = arith.constant 0 : index
    %c0_57 = arith.constant 0 : index
    %71 = vector.load %arg8[%c0_56, %c0_57] : memref<2x32xf32, #tpu.memory_space<vmem>>, vector<2x32xf32>
    %c0_i32_58 = arith.constant 0 : i32
    %72 = arith.index_cast %c0_i32_58 : i32 to index
    %c0_59 = arith.constant 0 : index
    %c0_60 = arith.constant 0 : index
    %73 = vector.load %arg9[%72, %c0_59, %c0_60] : memref<8x2x128xf32, #tpu.memory_space<vmem>>, vector<1x2x128xf32>
    %74 = vector.shape_cast %73 : vector<1x2x128xf32> to vector<2x128xf32>
    %cst_61 = arith.constant dense<0.000000e+00> : vector<2x128xf32>
    %75 = tpu.matmul %70, %4, %cst_61 {dimension_numbers = #tpu.dot_dimension_numbers<[1], [0], [0], [1], [0, 0, 1, 1], [], []>} : vector<2x32xf32>, vector<32x128xf32>, vector<2x128xf32> -> vector<2x128xf32>
    %76 = arith.addf %74, %75 : vector<2x128xf32>
    %77 = vector.extract_strided_slice %76 {offsets = [0, 0], sizes = [2, 32], strides = [1, 1]} : vector<2x128xf32> to vector<2x32xf32>
    %cst_62 = arith.constant 5.000000e-01 : f32
    %78 = vector.broadcast %cst_62 : f32 to vector<2x32xf32>
    %79 = arith.mulf %78, %77 : vector<2x32xf32>
    %80 = math.tanh %79 : vector<2x32xf32>
    %cst_63 = arith.constant 5.000000e-01 : f32
    %81 = vector.broadcast %cst_63 : f32 to vector<2x32xf32>
    %82 = arith.mulf %81, %80 : vector<2x32xf32>
    %cst_64 = arith.constant 5.000000e-01 : f32
    %83 = vector.broadcast %cst_64 : f32 to vector<2x32xf32>
    %84 = arith.addf %82, %83 : vector<2x32xf32>
    %85 = vector.extract_strided_slice %76 {offsets = [0, 32], sizes = [2, 32], strides = [1, 1]} : vector<2x128xf32> to vector<2x32xf32>
    %cst_65 = arith.constant 5.000000e-01 : f32
    %86 = vector.broadcast %cst_65 : f32 to vector<2x32xf32>
    %87 = arith.mulf %86, %85 : vector<2x32xf32>
    %88 = math.tanh %87 : vector<2x32xf32>
    %cst_66 = arith.constant 5.000000e-01 : f32
    %89 = vector.broadcast %cst_66 : f32 to vector<2x32xf32>
    %90 = arith.mulf %89, %88 : vector<2x32xf32>
    %cst_67 = arith.constant 5.000000e-01 : f32
    %91 = vector.broadcast %cst_67 : f32 to vector<2x32xf32>
    %92 = arith.addf %90, %91 : vector<2x32xf32>
    %93 = vector.extract_strided_slice %76 {offsets = [0, 64], sizes = [2, 32], strides = [1, 1]} : vector<2x128xf32> to vector<2x32xf32>
    %94 = math.tanh %93 : vector<2x32xf32>
    %95 = vector.extract_strided_slice %76 {offsets = [0, 96], sizes = [2, 32], strides = [1, 1]} : vector<2x128xf32> to vector<2x32xf32>
    %cst_68 = arith.constant 5.000000e-01 : f32
    %96 = vector.broadcast %cst_68 : f32 to vector<2x32xf32>
    %97 = arith.mulf %96, %95 : vector<2x32xf32>
    %98 = math.tanh %97 : vector<2x32xf32>
    %cst_69 = arith.constant 5.000000e-01 : f32
    %99 = vector.broadcast %cst_69 : f32 to vector<2x32xf32>
    %100 = arith.mulf %99, %98 : vector<2x32xf32>
    %cst_70 = arith.constant 5.000000e-01 : f32
    %101 = vector.broadcast %cst_70 : f32 to vector<2x32xf32>
    %102 = arith.addf %100, %101 : vector<2x32xf32>
    %103 = arith.mulf %92, %71 : vector<2x32xf32>
    %104 = arith.mulf %84, %94 : vector<2x32xf32>
    %105 = arith.addf %103, %104 : vector<2x32xf32>
    %106 = math.tanh %105 : vector<2x32xf32>
    %107 = arith.mulf %102, %106 : vector<2x32xf32>
    %108 = arith.index_cast %c0_i32_58 : i32 to index
    %c0_71 = arith.constant 0 : index
    %c0_72 = arith.constant 0 : index
    %109 = vector.load %arg6[%108, %c0_71, %c0_72] : memref<8x2x32xf32, #tpu.memory_space<vmem>>, vector<1x2x32xf32>
    %110 = vector.shape_cast %109 : vector<1x2x32xf32> to vector<2x32xf32>
    %111 = vector.shape_cast %107 : vector<2x32xf32> to vector<1x2x32xf32>
    tpu.vector_store %arg6[%108, %c0_71, %c0_72], %111 {strides = array<i32>} : memref<8x2x32xf32, #tpu.memory_space<vmem>>, vector<1x2x32xf32>,
    %c1_i32 = arith.constant 1 : i32
    %112 = arith.index_cast %c1_i32 : i32 to index
    %c0_73 = arith.constant 0 : index
    %c0_74 = arith.constant 0 : index
    %113 = vector.load %arg9[%112, %c0_73, %c0_74] : memref<8x2x128xf32, #tpu.memory_space<vmem>>, vector<1x2x128xf32>
    %114 = vector.shape_cast %113 : vector<1x2x128xf32> to vector<2x128xf32>
    %cst_75 = arith.constant dense<0.000000e+00> : vector<2x128xf32>
    %115 = tpu.matmul %107, %4, %cst_75 {dimension_numbers = #tpu.dot_dimension_numbers<[1], [0], [0], [1], [0, 0, 1, 1], [], []>} : vector<2x32xf32>, vector<32x128xf32>, vector<2x128xf32> -> vector<2x128xf32>
    %116 = arith.addf %114, %115 : vector<2x128xf32>
    %117 = vector.extract_strided_slice %116 {offsets = [0, 0], sizes = [2, 32], strides = [1, 1]} : vector<2x128xf32> to vector<2x32xf32>
    %cst_76 = arith.constant 5.000000e-01 : f32
    %118 = vector.broadcast %cst_76 : f32 to vector<2x32xf32>
    %119 = arith.mulf %118, %117 : vector<2x32xf32>
    %120 = math.tanh %119 : vector<2x32xf32>
    %cst_77 = arith.constant 5.000000e-01 : f32
    %121 = vector.broadcast %cst_77 : f32 to vector<2x32xf32>
    %122 = arith.mulf %121, %120 : vector<2x32xf32>
    %cst_78 = arith.constant 5.000000e-01 : f32
    %123 = vector.broadcast %cst_78 : f32 to vector<2x32xf32>
    %124 = arith.addf %122, %123 : vector<2x32xf32>
    %125 = vector.extract_strided_slice %116 {offsets = [0, 32], sizes = [2, 32], strides = [1, 1]} : vector<2x128xf32> to vector<2x32xf32>
    %cst_79 = arith.constant 5.000000e-01 : f32
    %126 = vector.broadcast %cst_79 : f32 to vector<2x32xf32>
    %127 = arith.mulf %126, %125 : vector<2x32xf32>
    %128 = math.tanh %127 : vector<2x32xf32>
    %cst_80 = arith.constant 5.000000e-01 : f32
    %129 = vector.broadcast %cst_80 : f32 to vector<2x32xf32>
    %130 = arith.mulf %129, %128 : vector<2x32xf32>
    %cst_81 = arith.constant 5.000000e-01 : f32
    %131 = vector.broadcast %cst_81 : f32 to vector<2x32xf32>
    %132 = arith.addf %130, %131 : vector<2x32xf32>
    %133 = vector.extract_strided_slice %116 {offsets = [0, 64], sizes = [2, 32], strides = [1, 1]} : vector<2x128xf32> to vector<2x32xf32>
    %134 = math.tanh %133 : vector<2x32xf32>
    %135 = vector.extract_strided_slice %116 {offsets = [0, 96], sizes = [2, 32], strides = [1, 1]} : vector<2x128xf32> to vector<2x32xf32>
    %cst_82 = arith.constant 5.000000e-01 : f32
    %136 = vector.broadcast %cst_82 : f32 to vector<2x32xf32>
    %137 = arith.mulf %136, %135 : vector<2x32xf32>
    %138 = math.tanh %137 : vector<2x32xf32>
    %cst_83 = arith.constant 5.000000e-01 : f32
    %139 = vector.broadcast %cst_83 : f32 to vector<2x32xf32>
    %140 = arith.mulf %139, %138 : vector<2x32xf32>
    %cst_84 = arith.constant 5.000000e-01 : f32
    %141 = vector.broadcast %cst_84 : f32 to vector<2x32xf32>
    %142 = arith.addf %140, %141 : vector<2x32xf32>
    %143 = arith.mulf %132, %105 : vector<2x32xf32>
    %144 = arith.mulf %124, %134 : vector<2x32xf32>
    %145 = arith.addf %143, %144 : vector<2x32xf32>
    %146 = math.tanh %145 : vector<2x32xf32>
    %147 = arith.mulf %142, %146 : vector<2x32xf32>
    %148 = arith.index_cast %c1_i32 : i32 to index
    %c0_85 = arith.constant 0 : index
    %c0_86 = arith.constant 0 : index
    %149 = vector.load %arg6[%148, %c0_85, %c0_86] : memref<8x2x32xf32, #tpu.memory_space<vmem>>, vector<1x2x32xf32>
    %150 = vector.shape_cast %149 : vector<1x2x32xf32> to vector<2x32xf32>
    %151 = vector.shape_cast %147 : vector<2x32xf32> to vector<1x2x32xf32>
    tpu.vector_store %arg6[%148, %c0_85, %c0_86], %151 {strides = array<i32>} : memref<8x2x32xf32, #tpu.memory_space<vmem>>, vector<1x2x32xf32>,
    %c2_i32 = arith.constant 2 : i32
    %152 = arith.index_cast %c2_i32 : i32 to index
    %c0_87 = arith.constant 0 : index
    %c0_88 = arith.constant 0 : index
    %153 = vector.load %arg9[%152, %c0_87, %c0_88] : memref<8x2x128xf32, #tpu.memory_space<vmem>>, vector<1x2x128xf32>
    %154 = vector.shape_cast %153 : vector<1x2x128xf32> to vector<2x128xf32>
    %cst_89 = arith.constant dense<0.000000e+00> : vector<2x128xf32>
    %155 = tpu.matmul %147, %4, %cst_89 {dimension_numbers = #tpu.dot_dimension_numbers<[1], [0], [0], [1], [0, 0, 1, 1], [], []>} : vector<2x32xf32>, vector<32x128xf32>, vector<2x128xf32> -> vector<2x128xf32>
    %156 = arith.addf %154, %155 : vector<2x128xf32>
    %157 = vector.extract_strided_slice %156 {offsets = [0, 0], sizes = [2, 32], strides = [1, 1]} : vector<2x128xf32> to vector<2x32xf32>
    %cst_90 = arith.constant 5.000000e-01 : f32
    %158 = vector.broadcast %cst_90 : f32 to vector<2x32xf32>
    %159 = arith.mulf %158, %157 : vector<2x32xf32>
    %160 = math.tanh %159 : vector<2x32xf32>
    %cst_91 = arith.constant 5.000000e-01 : f32
    %161 = vector.broadcast %cst_91 : f32 to vector<2x32xf32>
    %162 = arith.mulf %161, %160 : vector<2x32xf32>
    %cst_92 = arith.constant 5.000000e-01 : f32
    %163 = vector.broadcast %cst_92 : f32 to vector<2x32xf32>
    %164 = arith.addf %162, %163 : vector<2x32xf32>
    %165 = vector.extract_strided_slice %156 {offsets = [0, 32], sizes = [2, 32], strides = [1, 1]} : vector<2x128xf32> to vector<2x32xf32>
    %cst_93 = arith.constant 5.000000e-01 : f32
    %166 = vector.broadcast %cst_93 : f32 to vector<2x32xf32>
    %167 = arith.mulf %166, %165 : vector<2x32xf32>
    %168 = math.tanh %167 : vector<2x32xf32>
    %cst_94 = arith.constant 5.000000e-01 : f32
    %169 = vector.broadcast %cst_94 : f32 to vector<2x32xf32>
    %170 = arith.mulf %169, %168 : vector<2x32xf32>
    %cst_95 = arith.constant 5.000000e-01 : f32
    %171 = vector.broadcast %cst_95 : f32 to vector<2x32xf32>
    %172 = arith.addf %170, %171 : vector<2x32xf32>
    %173 = vector.extract_strided_slice %156 {offsets = [0, 64], sizes = [2, 32], strides = [1, 1]} : vector<2x128xf32> to vector<2x32xf32>
    %174 = math.tanh %173 : vector<2x32xf32>
    %175 = vector.extract_strided_slice %156 {offsets = [0, 96], sizes = [2, 32], strides = [1, 1]} : vector<2x128xf32> to vector<2x32xf32>
    %cst_96 = arith.constant 5.000000e-01 : f32
    %176 = vector.broadcast %cst_96 : f32 to vector<2x32xf32>
    %177 = arith.mulf %176, %175 : vector<2x32xf32>
    %178 = math.tanh %177 : vector<2x32xf32>
    %cst_97 = arith.constant 5.000000e-01 : f32
    %179 = vector.broadcast %cst_97 : f32 to vector<2x32xf32>
    %180 = arith.mulf %179, %178 : vector<2x32xf32>
    %cst_98 = arith.constant 5.000000e-01 : f32
    %181 = vector.broadcast %cst_98 : f32 to vector<2x32xf32>
    %182 = arith.addf %180, %181 : vector<2x32xf32>
    %183 = arith.mulf %172, %145 : vector<2x32xf32>
    %184 = arith.mulf %164, %174 : vector<2x32xf32>
    %185 = arith.addf %183, %184 : vector<2x32xf32>
    %186 = math.tanh %185 : vector<2x32xf32>
    %187 = arith.mulf %182, %186 : vector<2x32xf32>
    %188 = arith.index_cast %c2_i32 : i32 to index
    %c0_99 = arith.constant 0 : index
    %c0_100 = arith.constant 0 : index
    %189 = vector.load %arg6[%188, %c0_99, %c0_100] : memref<8x2x32xf32, #tpu.memory_space<vmem>>, vector<1x2x32xf32>
    %190 = vector.shape_cast %189 : vector<1x2x32xf32> to vector<2x32xf32>
    %191 = vector.shape_cast %187 : vector<2x32xf32> to vector<1x2x32xf32>
    tpu.vector_store %arg6[%188, %c0_99, %c0_100], %191 {strides = array<i32>} : memref<8x2x32xf32, #tpu.memory_space<vmem>>, vector<1x2x32xf32>,
    %c3_i32 = arith.constant 3 : i32
    %192 = arith.index_cast %c3_i32 : i32 to index
    %c0_101 = arith.constant 0 : index
    %c0_102 = arith.constant 0 : index
    %193 = vector.load %arg9[%192, %c0_101, %c0_102] : memref<8x2x128xf32, #tpu.memory_space<vmem>>, vector<1x2x128xf32>
    %194 = vector.shape_cast %193 : vector<1x2x128xf32> to vector<2x128xf32>
    %cst_103 = arith.constant dense<0.000000e+00> : vector<2x128xf32>
    %195 = tpu.matmul %187, %4, %cst_103 {dimension_numbers = #tpu.dot_dimension_numbers<[1], [0], [0], [1], [0, 0, 1, 1], [], []>} : vector<2x32xf32>, vector<32x128xf32>, vector<2x128xf32> -> vector<2x128xf32>
    %196 = arith.addf %194, %195 : vector<2x128xf32>
    %197 = vector.extract_strided_slice %196 {offsets = [0, 0], sizes = [2, 32], strides = [1, 1]} : vector<2x128xf32> to vector<2x32xf32>
    %cst_104 = arith.constant 5.000000e-01 : f32
    %198 = vector.broadcast %cst_104 : f32 to vector<2x32xf32>
    %199 = arith.mulf %198, %197 : vector<2x32xf32>
    %200 = math.tanh %199 : vector<2x32xf32>
    %cst_105 = arith.constant 5.000000e-01 : f32
    %201 = vector.broadcast %cst_105 : f32 to vector<2x32xf32>
    %202 = arith.mulf %201, %200 : vector<2x32xf32>
    %cst_106 = arith.constant 5.000000e-01 : f32
    %203 = vector.broadcast %cst_106 : f32 to vector<2x32xf32>
    %204 = arith.addf %202, %203 : vector<2x32xf32>
    %205 = vector.extract_strided_slice %196 {offsets = [0, 32], sizes = [2, 32], strides = [1, 1]} : vector<2x128xf32> to vector<2x32xf32>
    %cst_107 = arith.constant 5.000000e-01 : f32
    %206 = vector.broadcast %cst_107 : f32 to vector<2x32xf32>
    %207 = arith.mulf %206, %205 : vector<2x32xf32>
    %208 = math.tanh %207 : vector<2x32xf32>
    %cst_108 = arith.constant 5.000000e-01 : f32
    %209 = vector.broadcast %cst_108 : f32 to vector<2x32xf32>
    %210 = arith.mulf %209, %208 : vector<2x32xf32>
    %cst_109 = arith.constant 5.000000e-01 : f32
    %211 = vector.broadcast %cst_109 : f32 to vector<2x32xf32>
    %212 = arith.addf %210, %211 : vector<2x32xf32>
    %213 = vector.extract_strided_slice %196 {offsets = [0, 64], sizes = [2, 32], strides = [1, 1]} : vector<2x128xf32> to vector<2x32xf32>
    %214 = math.tanh %213 : vector<2x32xf32>
    %215 = vector.extract_strided_slice %196 {offsets = [0, 96], sizes = [2, 32], strides = [1, 1]} : vector<2x128xf32> to vector<2x32xf32>
    %cst_110 = arith.constant 5.000000e-01 : f32
    %216 = vector.broadcast %cst_110 : f32 to vector<2x32xf32>
    %217 = arith.mulf %216, %215 : vector<2x32xf32>
    %218 = math.tanh %217 : vector<2x32xf32>
    %cst_111 = arith.constant 5.000000e-01 : f32
    %219 = vector.broadcast %cst_111 : f32 to vector<2x32xf32>
    %220 = arith.mulf %219, %218 : vector<2x32xf32>
    %cst_112 = arith.constant 5.000000e-01 : f32
    %221 = vector.broadcast %cst_112 : f32 to vector<2x32xf32>
    %222 = arith.addf %220, %221 : vector<2x32xf32>
    %223 = arith.mulf %212, %185 : vector<2x32xf32>
    %224 = arith.mulf %204, %214 : vector<2x32xf32>
    %225 = arith.addf %223, %224 : vector<2x32xf32>
    %226 = math.tanh %225 : vector<2x32xf32>
    %227 = arith.mulf %222, %226 : vector<2x32xf32>
    %228 = arith.index_cast %c3_i32 : i32 to index
    %c0_113 = arith.constant 0 : index
    %c0_114 = arith.constant 0 : index
    %229 = vector.load %arg6[%228, %c0_113, %c0_114] : memref<8x2x32xf32, #tpu.memory_space<vmem>>, vector<1x2x32xf32>
    %230 = vector.shape_cast %229 : vector<1x2x32xf32> to vector<2x32xf32>
    %231 = vector.shape_cast %227 : vector<2x32xf32> to vector<1x2x32xf32>
    tpu.vector_store %arg6[%228, %c0_113, %c0_114], %231 {strides = array<i32>} : memref<8x2x32xf32, #tpu.memory_space<vmem>>, vector<1x2x32xf32>,
    %c4_i32 = arith.constant 4 : i32
    %232 = arith.index_cast %c4_i32 : i32 to index
    %c0_115 = arith.constant 0 : index
    %c0_116 = arith.constant 0 : index
    %233 = vector.load %arg9[%232, %c0_115, %c0_116] : memref<8x2x128xf32, #tpu.memory_space<vmem>>, vector<1x2x128xf32>
    %234 = vector.shape_cast %233 : vector<1x2x128xf32> to vector<2x128xf32>
    %cst_117 = arith.constant dense<0.000000e+00> : vector<2x128xf32>
    %235 = tpu.matmul %227, %4, %cst_117 {dimension_numbers = #tpu.dot_dimension_numbers<[1], [0], [0], [1], [0, 0, 1, 1], [], []>} : vector<2x32xf32>, vector<32x128xf32>, vector<2x128xf32> -> vector<2x128xf32>
    %236 = arith.addf %234, %235 : vector<2x128xf32>
    %237 = vector.extract_strided_slice %236 {offsets = [0, 0], sizes = [2, 32], strides = [1, 1]} : vector<2x128xf32> to vector<2x32xf32>
    %cst_118 = arith.constant 5.000000e-01 : f32
    %238 = vector.broadcast %cst_118 : f32 to vector<2x32xf32>
    %239 = arith.mulf %238, %237 : vector<2x32xf32>
    %240 = math.tanh %239 : vector<2x32xf32>
    %cst_119 = arith.constant 5.000000e-01 : f32
    %241 = vector.broadcast %cst_119 : f32 to vector<2x32xf32>
    %242 = arith.mulf %241, %240 : vector<2x32xf32>
    %cst_120 = arith.constant 5.000000e-01 : f32
    %243 = vector.broadcast %cst_120 : f32 to vector<2x32xf32>
    %244 = arith.addf %242, %243 : vector<2x32xf32>
    %245 = vector.extract_strided_slice %236 {offsets = [0, 32], sizes = [2, 32], strides = [1, 1]} : vector<2x128xf32> to vector<2x32xf32>
    %cst_121 = arith.constant 5.000000e-01 : f32
    %246 = vector.broadcast %cst_121 : f32 to vector<2x32xf32>
    %247 = arith.mulf %246, %245 : vector<2x32xf32>
    %248 = math.tanh %247 : vector<2x32xf32>
    %cst_122 = arith.constant 5.000000e-01 : f32
    %249 = vector.broadcast %cst_122 : f32 to vector<2x32xf32>
    %250 = arith.mulf %249, %248 : vector<2x32xf32>
    %cst_123 = arith.constant 5.000000e-01 : f32
    %251 = vector.broadcast %cst_123 : f32 to vector<2x32xf32>
    %252 = arith.addf %250, %251 : vector<2x32xf32>
    %253 = vector.extract_strided_slice %236 {offsets = [0, 64], sizes = [2, 32], strides = [1, 1]} : vector<2x128xf32> to vector<2x32xf32>
    %254 = math.tanh %253 : vector<2x32xf32>
    %255 = vector.extract_strided_slice %236 {offsets = [0, 96], sizes = [2, 32], strides = [1, 1]} : vector<2x128xf32> to vector<2x32xf32>
    %cst_124 = arith.constant 5.000000e-01 : f32
    %256 = vector.broadcast %cst_124 : f32 to vector<2x32xf32>
    %257 = arith.mulf %256, %255 : vector<2x32xf32>
    %258 = math.tanh %257 : vector<2x32xf32>
    %cst_125 = arith.constant 5.000000e-01 : f32
    %259 = vector.broadcast %cst_125 : f32 to vector<2x32xf32>
    %260 = arith.mulf %259, %258 : vector<2x32xf32>
    %cst_126 = arith.constant 5.000000e-01 : f32
    %261 = vector.broadcast %cst_126 : f32 to vector<2x32xf32>
    %262 = arith.addf %260, %261 : vector<2x32xf32>
    %263 = arith.mulf %252, %225 : vector<2x32xf32>
    %264 = arith.mulf %244, %254 : vector<2x32xf32>
    %265 = arith.addf %263, %264 : vector<2x32xf32>
    %266 = math.tanh %265 : vector<2x32xf32>
    %267 = arith.mulf %262, %266 : vector<2x32xf32>
    %268 = arith.index_cast %c4_i32 : i32 to index
    %c0_127 = arith.constant 0 : index
    %c0_128 = arith.constant 0 : index
    %269 = vector.load %arg6[%268, %c0_127, %c0_128] : memref<8x2x32xf32, #tpu.memory_space<vmem>>, vector<1x2x32xf32>
    %270 = vector.shape_cast %269 : vector<1x2x32xf32> to vector<2x32xf32>
    %271 = vector.shape_cast %267 : vector<2x32xf32> to vector<1x2x32xf32>
    tpu.vector_store %arg6[%268, %c0_127, %c0_128], %271 {strides = array<i32>} : memref<8x2x32xf32, #tpu.memory_space<vmem>>, vector<1x2x32xf32>,
    %c5_i32 = arith.constant 5 : i32
    %272 = arith.index_cast %c5_i32 : i32 to index
    %c0_129 = arith.constant 0 : index
    %c0_130 = arith.constant 0 : index
    %273 = vector.load %arg9[%272, %c0_129, %c0_130] : memref<8x2x128xf32, #tpu.memory_space<vmem>>, vector<1x2x128xf32>
    %274 = vector.shape_cast %273 : vector<1x2x128xf32> to vector<2x128xf32>
    %cst_131 = arith.constant dense<0.000000e+00> : vector<2x128xf32>
    %275 = tpu.matmul %267, %4, %cst_131 {dimension_numbers = #tpu.dot_dimension_numbers<[1], [0], [0], [1], [0, 0, 1, 1], [], []>} : vector<2x32xf32>, vector<32x128xf32>, vector<2x128xf32> -> vector<2x128xf32>
    %276 = arith.addf %274, %275 : vector<2x128xf32>
    %277 = vector.extract_strided_slice %276 {offsets = [0, 0], sizes = [2, 32], strides = [1, 1]} : vector<2x128xf32> to vector<2x32xf32>
    %cst_132 = arith.constant 5.000000e-01 : f32
    %278 = vector.broadcast %cst_132 : f32 to vector<2x32xf32>
    %279 = arith.mulf %278, %277 : vector<2x32xf32>
    %280 = math.tanh %279 : vector<2x32xf32>
    %cst_133 = arith.constant 5.000000e-01 : f32
    %281 = vector.broadcast %cst_133 : f32 to vector<2x32xf32>
    %282 = arith.mulf %281, %280 : vector<2x32xf32>
    %cst_134 = arith.constant 5.000000e-01 : f32
    %283 = vector.broadcast %cst_134 : f32 to vector<2x32xf32>
    %284 = arith.addf %282, %283 : vector<2x32xf32>
    %285 = vector.extract_strided_slice %276 {offsets = [0, 32], sizes = [2, 32], strides = [1, 1]} : vector<2x128xf32> to vector<2x32xf32>
    %cst_135 = arith.constant 5.000000e-01 : f32
    %286 = vector.broadcast %cst_135 : f32 to vector<2x32xf32>
    %287 = arith.mulf %286, %285 : vector<2x32xf32>
    %288 = math.tanh %287 : vector<2x32xf32>
    %cst_136 = arith.constant 5.000000e-01 : f32
    %289 = vector.broadcast %cst_136 : f32 to vector<2x32xf32>
    %290 = arith.mulf %289, %288 : vector<2x32xf32>
    %cst_137 = arith.constant 5.000000e-01 : f32
    %291 = vector.broadcast %cst_137 : f32 to vector<2x32xf32>
    %292 = arith.addf %290, %291 : vector<2x32xf32>
    %293 = vector.extract_strided_slice %276 {offsets = [0, 64], sizes = [2, 32], strides = [1, 1]} : vector<2x128xf32> to vector<2x32xf32>
    %294 = math.tanh %293 : vector<2x32xf32>
    %295 = vector.extract_strided_slice %276 {offsets = [0, 96], sizes = [2, 32], strides = [1, 1]} : vector<2x128xf32> to vector<2x32xf32>
    %cst_138 = arith.constant 5.000000e-01 : f32
    %296 = vector.broadcast %cst_138 : f32 to vector<2x32xf32>
    %297 = arith.mulf %296, %295 : vector<2x32xf32>
    %298 = math.tanh %297 : vector<2x32xf32>
    %cst_139 = arith.constant 5.000000e-01 : f32
    %299 = vector.broadcast %cst_139 : f32 to vector<2x32xf32>
    %300 = arith.mulf %299, %298 : vector<2x32xf32>
    %cst_140 = arith.constant 5.000000e-01 : f32
    %301 = vector.broadcast %cst_140 : f32 to vector<2x32xf32>
    %302 = arith.addf %300, %301 : vector<2x32xf32>
    %303 = arith.mulf %292, %265 : vector<2x32xf32>
    %304 = arith.mulf %284, %294 : vector<2x32xf32>
    %305 = arith.addf %303, %304 : vector<2x32xf32>
    %306 = math.tanh %305 : vector<2x32xf32>
    %307 = arith.mulf %302, %306 : vector<2x32xf32>
    %308 = arith.index_cast %c5_i32 : i32 to index
    %c0_141 = arith.constant 0 : index
    %c0_142 = arith.constant 0 : index
    %309 = vector.load %arg6[%308, %c0_141, %c0_142] : memref<8x2x32xf32, #tpu.memory_space<vmem>>, vector<1x2x32xf32>
    %310 = vector.shape_cast %309 : vector<1x2x32xf32> to vector<2x32xf32>
    %311 = vector.shape_cast %307 : vector<2x32xf32> to vector<1x2x32xf32>
    tpu.vector_store %arg6[%308, %c0_141, %c0_142], %311 {strides = array<i32>} : memref<8x2x32xf32, #tpu.memory_space<vmem>>, vector<1x2x32xf32>,
    %c6_i32 = arith.constant 6 : i32
    %312 = arith.index_cast %c6_i32 : i32 to index
    %c0_143 = arith.constant 0 : index
    %c0_144 = arith.constant 0 : index
    %313 = vector.load %arg9[%312, %c0_143, %c0_144] : memref<8x2x128xf32, #tpu.memory_space<vmem>>, vector<1x2x128xf32>
    %314 = vector.shape_cast %313 : vector<1x2x128xf32> to vector<2x128xf32>
    %cst_145 = arith.constant dense<0.000000e+00> : vector<2x128xf32>
    %315 = tpu.matmul %307, %4, %cst_145 {dimension_numbers = #tpu.dot_dimension_numbers<[1], [0], [0], [1], [0, 0, 1, 1], [], []>} : vector<2x32xf32>, vector<32x128xf32>, vector<2x128xf32> -> vector<2x128xf32>
    %316 = arith.addf %314, %315 : vector<2x128xf32>
    %317 = vector.extract_strided_slice %316 {offsets = [0, 0], sizes = [2, 32], strides = [1, 1]} : vector<2x128xf32> to vector<2x32xf32>
    %cst_146 = arith.constant 5.000000e-01 : f32
    %318 = vector.broadcast %cst_146 : f32 to vector<2x32xf32>
    %319 = arith.mulf %318, %317 : vector<2x32xf32>
    %320 = math.tanh %319 : vector<2x32xf32>
    %cst_147 = arith.constant 5.000000e-01 : f32
    %321 = vector.broadcast %cst_147 : f32 to vector<2x32xf32>
    %322 = arith.mulf %321, %320 : vector<2x32xf32>
    %cst_148 = arith.constant 5.000000e-01 : f32
    %323 = vector.broadcast %cst_148 : f32 to vector<2x32xf32>
    %324 = arith.addf %322, %323 : vector<2x32xf32>
    %325 = vector.extract_strided_slice %316 {offsets = [0, 32], sizes = [2, 32], strides = [1, 1]} : vector<2x128xf32> to vector<2x32xf32>
    %cst_149 = arith.constant 5.000000e-01 : f32
    %326 = vector.broadcast %cst_149 : f32 to vector<2x32xf32>
    %327 = arith.mulf %326, %325 : vector<2x32xf32>
    %328 = math.tanh %327 : vector<2x32xf32>
    %cst_150 = arith.constant 5.000000e-01 : f32
    %329 = vector.broadcast %cst_150 : f32 to vector<2x32xf32>
    %330 = arith.mulf %329, %328 : vector<2x32xf32>
    %cst_151 = arith.constant 5.000000e-01 : f32
    %331 = vector.broadcast %cst_151 : f32 to vector<2x32xf32>
    %332 = arith.addf %330, %331 : vector<2x32xf32>
    %333 = vector.extract_strided_slice %316 {offsets = [0, 64], sizes = [2, 32], strides = [1, 1]} : vector<2x128xf32> to vector<2x32xf32>
    %334 = math.tanh %333 : vector<2x32xf32>
    %335 = vector.extract_strided_slice %316 {offsets = [0, 96], sizes = [2, 32], strides = [1, 1]} : vector<2x128xf32> to vector<2x32xf32>
    %cst_152 = arith.constant 5.000000e-01 : f32
    %336 = vector.broadcast %cst_152 : f32 to vector<2x32xf32>
    %337 = arith.mulf %336, %335 : vector<2x32xf32>
    %338 = math.tanh %337 : vector<2x32xf32>
    %cst_153 = arith.constant 5.000000e-01 : f32
    %339 = vector.broadcast %cst_153 : f32 to vector<2x32xf32>
    %340 = arith.mulf %339, %338 : vector<2x32xf32>
    %cst_154 = arith.constant 5.000000e-01 : f32
    %341 = vector.broadcast %cst_154 : f32 to vector<2x32xf32>
    %342 = arith.addf %340, %341 : vector<2x32xf32>
    %343 = arith.mulf %332, %305 : vector<2x32xf32>
    %344 = arith.mulf %324, %334 : vector<2x32xf32>
    %345 = arith.addf %343, %344 : vector<2x32xf32>
    %346 = math.tanh %345 : vector<2x32xf32>
    %347 = arith.mulf %342, %346 : vector<2x32xf32>
    %348 = arith.index_cast %c6_i32 : i32 to index
    %c0_155 = arith.constant 0 : index
    %c0_156 = arith.constant 0 : index
    %349 = vector.load %arg6[%348, %c0_155, %c0_156] : memref<8x2x32xf32, #tpu.memory_space<vmem>>, vector<1x2x32xf32>
    %350 = vector.shape_cast %349 : vector<1x2x32xf32> to vector<2x32xf32>
    %351 = vector.shape_cast %347 : vector<2x32xf32> to vector<1x2x32xf32>
    tpu.vector_store %arg6[%348, %c0_155, %c0_156], %351 {strides = array<i32>} : memref<8x2x32xf32, #tpu.memory_space<vmem>>, vector<1x2x32xf32>,
    %c7_i32 = arith.constant 7 : i32
    %352 = arith.index_cast %c7_i32 : i32 to index
    %c0_157 = arith.constant 0 : index
    %c0_158 = arith.constant 0 : index
    %353 = vector.load %arg9[%352, %c0_157, %c0_158] : memref<8x2x128xf32, #tpu.memory_space<vmem>>, vector<1x2x128xf32>
    %354 = vector.shape_cast %353 : vector<1x2x128xf32> to vector<2x128xf32>
    %cst_159 = arith.constant dense<0.000000e+00> : vector<2x128xf32>
    %355 = tpu.matmul %347, %4, %cst_159 {dimension_numbers = #tpu.dot_dimension_numbers<[1], [0], [0], [1], [0, 0, 1, 1], [], []>} : vector<2x32xf32>, vector<32x128xf32>, vector<2x128xf32> -> vector<2x128xf32>
    %356 = arith.addf %354, %355 : vector<2x128xf32>
    %357 = vector.extract_strided_slice %356 {offsets = [0, 0], sizes = [2, 32], strides = [1, 1]} : vector<2x128xf32> to vector<2x32xf32>
    %cst_160 = arith.constant 5.000000e-01 : f32
    %358 = vector.broadcast %cst_160 : f32 to vector<2x32xf32>
    %359 = arith.mulf %358, %357 : vector<2x32xf32>
    %360 = math.tanh %359 : vector<2x32xf32>
    %cst_161 = arith.constant 5.000000e-01 : f32
    %361 = vector.broadcast %cst_161 : f32 to vector<2x32xf32>
    %362 = arith.mulf %361, %360 : vector<2x32xf32>
    %cst_162 = arith.constant 5.000000e-01 : f32
    %363 = vector.broadcast %cst_162 : f32 to vector<2x32xf32>
    %364 = arith.addf %362, %363 : vector<2x32xf32>
    %365 = vector.extract_strided_slice %356 {offsets = [0, 32], sizes = [2, 32], strides = [1, 1]} : vector<2x128xf32> to vector<2x32xf32>
    %cst_163 = arith.constant 5.000000e-01 : f32
    %366 = vector.broadcast %cst_163 : f32 to vector<2x32xf32>
    %367 = arith.mulf %366, %365 : vector<2x32xf32>
    %368 = math.tanh %367 : vector<2x32xf32>
    %cst_164 = arith.constant 5.000000e-01 : f32
    %369 = vector.broadcast %cst_164 : f32 to vector<2x32xf32>
    %370 = arith.mulf %369, %368 : vector<2x32xf32>
    %cst_165 = arith.constant 5.000000e-01 : f32
    %371 = vector.broadcast %cst_165 : f32 to vector<2x32xf32>
    %372 = arith.addf %370, %371 : vector<2x32xf32>
    %373 = vector.extract_strided_slice %356 {offsets = [0, 64], sizes = [2, 32], strides = [1, 1]} : vector<2x128xf32> to vector<2x32xf32>
    %374 = math.tanh %373 : vector<2x32xf32>
    %375 = vector.extract_strided_slice %356 {offsets = [0, 96], sizes = [2, 32], strides = [1, 1]} : vector<2x128xf32> to vector<2x32xf32>
    %cst_166 = arith.constant 5.000000e-01 : f32
    %376 = vector.broadcast %cst_166 : f32 to vector<2x32xf32>
    %377 = arith.mulf %376, %375 : vector<2x32xf32>
    %378 = math.tanh %377 : vector<2x32xf32>
    %cst_167 = arith.constant 5.000000e-01 : f32
    %379 = vector.broadcast %cst_167 : f32 to vector<2x32xf32>
    %380 = arith.mulf %379, %378 : vector<2x32xf32>
    %cst_168 = arith.constant 5.000000e-01 : f32
    %381 = vector.broadcast %cst_168 : f32 to vector<2x32xf32>
    %382 = arith.addf %380, %381 : vector<2x32xf32>
    %383 = arith.mulf %372, %345 : vector<2x32xf32>
    %384 = arith.mulf %364, %374 : vector<2x32xf32>
    %385 = arith.addf %383, %384 : vector<2x32xf32>
    %386 = math.tanh %385 : vector<2x32xf32>
    %387 = arith.mulf %382, %386 : vector<2x32xf32>
    %388 = arith.index_cast %c7_i32 : i32 to index
    %c0_169 = arith.constant 0 : index
    %c0_170 = arith.constant 0 : index
    %389 = vector.load %arg6[%388, %c0_169, %c0_170] : memref<8x2x32xf32, #tpu.memory_space<vmem>>, vector<1x2x32xf32>
    %390 = vector.shape_cast %389 : vector<1x2x32xf32> to vector<2x32xf32>
    %391 = vector.shape_cast %387 : vector<2x32xf32> to vector<1x2x32xf32>
    tpu.vector_store %arg6[%388, %c0_169, %c0_170], %391 {strides = array<i32>} : memref<8x2x32xf32, #tpu.memory_space<vmem>>, vector<1x2x32xf32>,
    %c8_i32 = arith.constant 8 : i32
    %c0_171 = arith.constant 0 : index
    %c0_172 = arith.constant 0 : index
    %392 = vector.load %arg7[%c0_171, %c0_172] : memref<2x32xf32, #tpu.memory_space<vmem>>, vector<2x32xf32>
    tpu.vector_store %arg7[%c0_171, %c0_172], %387 {strides = array<i32>} : memref<2x32xf32, #tpu.memory_space<vmem>>, vector<2x32xf32>,
    %c0_173 = arith.constant 0 : index
    %c0_174 = arith.constant 0 : index
    %393 = vector.load %arg8[%c0_173, %c0_174] : memref<2x32xf32, #tpu.memory_space<vmem>>, vector<2x32xf32>
    tpu.vector_store %arg8[%c0_173, %c0_174], %385 {strides = array<i32>} : memref<2x32xf32, #tpu.memory_space<vmem>>, vector<2x32xf32>,
    return
  }
  func.func @transform_0(%arg0: i32, %arg1: i32) -> (i32, i32, i32) {
    %c0_i32 = arith.constant 0 : i32
    %c0_i32_0 = arith.constant 0 : i32
    return %arg1, %arg0, %c0_i32 : i32, i32, i32
  }
  func.func @transform_1(%arg0: i32, %arg1: i32) -> (i32, i32) {
    %c0_i32 = arith.constant 0 : i32
    %c0_i32_0 = arith.constant 0 : i32
    %c0_i32_1 = arith.constant 0 : i32
    return %c0_i32, %c0_i32_0 : i32, i32
  }
  func.func @transform_2(%arg0: i32, %arg1: i32) -> (i32, i32) {
    %c0_i32 = arith.constant 0 : i32
    %c0_i32_0 = arith.constant 0 : i32
    %c0_i32_1 = arith.constant 0 : i32
    return %c0_i32, %c0_i32_0 : i32, i32
  }
  func.func @transform_3(%arg0: i32, %arg1: i32) -> (i32, i32) {
    %c0_i32 = arith.constant 0 : i32
    %c0_i32_0 = arith.constant 0 : i32
    %c0_i32_1 = arith.constant 0 : i32
    return %c0_i32, %c0_i32_0 : i32, i32
  }
  func.func @transform_4(%arg0: i32, %arg1: i32) -> (i32, i32, i32) {
    %c0_i32 = arith.constant 0 : i32
    %c0_i32_0 = arith.constant 0 : i32
    return %arg1, %arg0, %c0_i32 : i32, i32, i32
  }
}

</mosaic_0001>

<llo_original>
// kernel: lstm_classifier_forward.1
$region0: #{lstm_classifier_forward.1}
  #allocation0 [shape = 'u32[]', space=smem, size = 0x4, offset = 0x4, fixed_abs, tag = 'smem constant byte address 0x4 - core index']
  #allocation1 [shape = 'u32[144,128]{1,0:T(1,128)}', space=vmem, size = 0x12000, scoped, tag = 'internal scratch']
  #allocation2 [shape = 'f32[2,32]{1,0:T(2,128)}', space=vmem, size = 0x400, scoped, tag = 'scratch operand']
  #allocation3 [shape = 'f32[2,32]{1,0:T(2,128)}', space=vmem, size = 0x400, scoped, tag = 'scratch operand']
  #allocation4 [shape = 'f32[8,2,128]{2,1,0:T(2,128)}', space=vmem, size = 0x2000, scoped, tag = 'scratch operand']
  %s0 = inlined_call_operand.vmem [shape: f32[8,2,32], index: 0, kind: input, shape index: {}]
  %s1 = inlined_call_operand.vmem [shape: f32[32,128], index: 1, kind: input, shape index: {}]
  %s2 = inlined_call_operand.hbm [shape: f32[32,128], index: 2, kind: input, shape index: {}]
  %s3 = inlined_call_operand.vmem [shape: f32[1,128], index: 3, kind: input, shape index: {}]
  %s4 = inlined_call_operand.vmem [shape: f32[8,2,32], index: 4, kind: output, shape index: {}]
  %s5 = sld [smem:[#allocation0]]
  $region34: #{lstm_classifier_forward.1} parent=0
    _
  %s7 = ssub.s32 1, %s5
  %s8 = scalar_select 0, %s7, %s5
  $region1: #{lstm_classifier_forward.1} parent=0
    #allocation5 [shape = 'u8[16384]{0}', space=vmem, size = 0x4000, scoped, tag = 'input window, operand 2, single buffered']
    #allocation6 [shape = 's32[1]{0}', space=sflag, size = 0x4, scoped, tag = 'scoped memory for lstm_classifier_forward.1']
    %9 = vsyncpa [#allocation6], 0
    // Predicated region
    $region2: #{lstm_classifier_forward.1} parent=1 // pred_check
      _
    $region3: #{lstm_classifier_forward.1} parent=1 // pred_check_branch
      %11 = sbr.rel (0) target = $region5
    $region4: #{lstm_classifier_forward.1} parent=1 // pred_region
      _
    $region5: #{lstm_classifier_forward.1} parent=1 // pred_fallthru
      _
    // Predicated region
    $region6: #{lstm_classifier_forward.1} parent=1 // pred_check
      _
    $region7: #{lstm_classifier_forward.1} parent=1 // pred_check_branch
      %13 = sbr.rel (0) target = $region9
    $region8: #{lstm_classifier_forward.1} parent=1 // pred_region
      _
    $region9: #{lstm_classifier_forward.1} parent=1 // pred_fallthru
      _
    // Predicated region
    $region10: #{lstm_classifier_forward.1} parent=1 // pred_check
      _
    $region11: #{lstm_classifier_forward.1} parent=1 // pred_check_branch
      %15 = sbr.rel (0) target = $region13
    $region12: #{lstm_classifier_forward.1} parent=1 // pred_region
      %s17 = ssub.s32 512, 512
      %18 = vsyncadd [#allocation6], %s17
      %s19 = sshll.u32 [#allocation5], 4
      %s20 = int_to_ptr.vmem [resolvable:$true] %s19
      %25 = dma.hbm_to_vmem [thread:$0]  %s2, 512, %s20, [#allocation6], 128, 128, 8
    $region13: #{lstm_classifier_forward.1} parent=1 // pred_fallthru
      _
    // Predicated region
    $region14: #{lstm_classifier_forward.1} parent=1 // pred_check
      _
    $region15: #{lstm_classifier_forward.1} parent=1 // pred_check_branch
      %27 = sbr.rel (0) target = $region17
    $region16: #{lstm_classifier_forward.1} parent=1 // pred_region
      _
    $region17: #{lstm_classifier_forward.1} parent=1 // pred_fallthru
      _
    // Predicated region
    $region18: #{lstm_classifier_forward.1} parent=1 // pred_check
      _
    $region19: #{lstm_classifier_forward.1} parent=1 // pred_check_branch
      %29 = sbr.rel (0) target = $region21
    $region20: #{lstm_classifier_forward.1} parent=1 // pred_region
      %30 = dma.done [#allocation6], 512
    $region21: #{lstm_classifier_forward.1} parent=1 // pred_fallthru
      _
    %p31 = scmp.eq.s32.totalorder 0, 0
    // Predicated region
    $region22: #{lstm_classifier_forward.1} parent=1 // pred_check
      %p32 = pneg %p31
    $region23: #{lstm_classifier_forward.1} parent=1 // pred_check_branch
      %34 = sbr.rel (%p32) target = $region25
    $region24: #{lstm_classifier_forward.1} parent=1 // pred_region
      %vm35 = vcmask 254976
      %36 = vst.msk [vmem:[#allocation2] sm:$0x3] %vm35, 0.0
      %37 = vst.msk [vmem:[#allocation3] sm:$0x3] %vm35, 0.0
    $region25: #{lstm_classifier_forward.1} parent=1 // pred_fallthru
      _
    %v38 = vld [vmem:[%s1] sm:$0xff]
    %v39 = vld [vmem:[%s1 + $0x8] sm:$0xff]
    %v40 = vld [vmem:[%s1 + $0x10] sm:$0xff]
    %v41 = vld [vmem:[%s1 + $0x18] sm:$0xff]
    %v42 = vld [vmem:[#allocation5] sm:$0xff]
    %v43 = vld [vmem:[#allocation5 + $0x8] sm:$0xff]
    %v44 = vld [vmem:[#allocation5 + $0x10] sm:$0xff]
    %v45 = vld [vmem:[#allocation5 + $0x18] sm:$0xff]
    %v46 = vld [vmem:[%s3] sm:$0x1]
    %v47 = vld [vmem:[%s0] sm:$0x3]
    %v49 = vlaneseq
    %v50 = vshrl.u32 %v49, 7
    %v51 = vsub.s32 0, %v50
    %v52 = vrot.slane %v46, %v51
    %vm54 = vcmask 261120
    %v56 = vsel %vm54, %v47, 0
    %58 = vmatprep.subr.mxu0 0.0
    %59 = vmatpush1.msra.mxu0 %v38
    %60 = vmatprep.subr.mxu0 0.0
    %61 = vmatpush1.msra.mxu0 %v39
    %62 = vmatprep.subr.mxu0 0.0
    %63 = vmatpush1.msra.mxu0 %v40
    %64 = vmatprep.subr.mxu0 0.0
    %65 = vmatpush1.msra.mxu0 %v41
    %66 = vmatprep.subr.mxu0 0.0
    %67 = vmatpush1.msra.mxu0 0.0
    %68 = vmatprep.subr.mxu0 0.0
    %69 = vmatpush1.msra.mxu0 0.0
    %70 = vmatprep.subr.mxu0 0.0
    %71 = vmatpush1.msra.mxu0 0.0
    %72 = vmatprep.subr.mxu0 0.0
    %73 = vmatpush1.msra.mxu0 0.0
    %74 = vmatprep.subr.mxu0 0.0
    %75 = vmatpush1.msra.mxu0 0.0
    %76 = vmatprep.subr.mxu0 0.0
    %77 = vmatpush1.msra.mxu0 0.0
    %78 = vmatprep.subr.mxu0 0.0
    %79 = vmatpush1.msra.mxu0 0.0
    %80 = vmatprep.subr.mxu0 0.0
    %81 = vmatpush1.msra.mxu0 0.0
    %82 = vmatprep.subr.mxu0 0.0
    %83 = vmatpush1.msra.mxu0 0.0
    %84 = vmatprep.subr.mxu0 0.0
    %85 = vmatpush1.msra.mxu0 0.0
    %86 = vmatprep.subr.mxu0 0.0
    %87 = vmatpush1.msra.mxu0 0.0
    %88 = vmatprep.subr.mxu0 0.0
    %89 = vmatpush1.msra.mxu0 0.0
    %90 = vmatprep.subr.mxu0 0.0
    %91 = vmatpush1.msra.mxu0 0.0
    %92 = vmatprep.subr.mxu0 0.0
    %93 = vmatpush1.msra.mxu0 0.0
    %94 = vmatprep.subr.mxu0 0.0
    %95 = vmatpush1.msra.mxu0 0.0
    %96 = vmatprep.subr.mxu0 0.0
    %97 = vmatpush1.msra.mxu0 0.0
    %98 = vmatprep.subr.mxu0 0.0
    %99 = vmatpush1.msra.mxu0 0.0
    %100 = vmatprep.subr.mxu0 0.0
    %101 = vmatpush1.msra.mxu0 0.0
    %102 = vmatprep.subr.mxu0 0.0
    %103 = vmatpush1.msra.mxu0 0.0
    %104 = vmatprep.subr.mxu0 0.0
    %105 = vmatpush1.msra.mxu0 0.0
    %106 = vmatprep.subr.mxu0 0.0
    %107 = vmatpush1.msra.mxu0 0.0
    %108 = vmatprep.subr.mxu0 0.0
    %109 = vmatpush1.msra.mxu0 0.0
    %110 = vmatprep.subr.mxu0 0.0
    %111 = vmatpush1.msra.mxu0 0.0
    %112 = vmatprep.subr.mxu0 0.0
    %113 = vmatpush1.msra.mxu0 0.0
    %114 = vmatprep.subr.mxu0 0.0
    %115 = vmatpush1.msra.mxu0 0.0
    %116 = vmatprep.subr.mxu0 0.0
    %117 = vmatpush1.msra.mxu0 0.0
    %118 = vmatprep.subr.mxu0 0.0
    %119 = vmatpush1.msra.mxu0 0.0
    %120 = vmatprep.subr.mxu0 0.0
    %121 = vmatpush1.msra.mxu0 0.0
    %122 = vmatprep.mubr.f32.mxu0 0.0
    %123 = vmatmul.mubr.f32.gmra.mrb[0].mxu0 %v56
    %v124 = vpop.f32.mrb[0].mxu0
    %v125 = vadd.f32 %v52, %v124
    %v126 = vpop.f32.mrb[0].mxu0
    %127 = vdwg.mxu0
    %128 = vst [vmem:[#allocation4] sm:$0x3] %v125
    %s129 = scalar_lea.vmem %s0, 2
    %v130 = vld [vmem:[%s129] sm:$0x3]
    %v132 = vsel %vm54, %v130, 0
    %134 = vmatprep.subr.mxu0 0.0
    %135 = vmatpush1.msra.mxu0 %v38
    %136 = vmatprep.subr.mxu0 0.0
    %137 = vmatpush1.msra.mxu0 %v39
    %138 = vmatprep.subr.mxu0 0.0
    %139 = vmatpush1.msra.mxu0 %v40
    %140 = vmatprep.subr.mxu0 0.0
    %141 = vmatpush1.msra.mxu0 %v41
    %142 = vmatprep.subr.mxu0 0.0
    %143 = vmatpush1.msra.mxu0 0.0
    %144 = vmatprep.subr.mxu0 0.0
    %145 = vmatpush1.msra.mxu0 0.0
    %146 = vmatprep.subr.mxu0 0.0
    %147 = vmatpush1.msra.mxu0 0.0
    %148 = vmatprep.subr.mxu0 0.0
    %149 = vmatpush1.msra.mxu0 0.0
    %150 = vmatprep.subr.mxu0 0.0
    %151 = vmatpush1.msra.mxu0 0.0
    %152 = vmatprep.subr.mxu0 0.0
    %153 = vmatpush1.msra.mxu0 0.0
    %154 = vmatprep.subr.mxu0 0.0
    %155 = vmatpush1.msra.mxu0 0.0
    %156 = vmatprep.subr.mxu0 0.0
    %157 = vmatpush1.msra.mxu0 0.0
    %158 = vmatprep.subr.mxu0 0.0
    %159 = vmatpush1.msra.mxu0 0.0
    %160 = vmatprep.subr.mxu0 0.0
    %161 = vmatpush1.msra.mxu0 0.0
    %162 = vmatprep.subr.mxu0 0.0
    %163 = vmatpush1.msra.mxu0 0.0
    %164 = vmatprep.subr.mxu0 0.0
    %165 = vmatpush1.msra.mxu0 0.0
    %166 = vmatprep.subr.mxu0 0.0
    %167 = vmatpush1.msra.mxu0 0.0
    %168 = vmatprep.subr.mxu0 0.0
    %169 = vmatpush1.msra.mxu0 0.0
    %170 = vmatprep.subr.mxu0 0.0
    %171 = vmatpush1.msra.mxu0 0.0
    %172 = vmatprep.subr.mxu0 0.0
    %173 = vmatpush1.msra.mxu0 0.0
    %174 = vmatprep.subr.mxu0 0.0
    %175 = vmatpush1.msra.mxu0 0.0
    %176 = vmatprep.subr.mxu0 0.0
    %177 = vmatpush1.msra.mxu0 0.0
    %178 = vmatprep.subr.mxu0 0.0
    %179 = vmatpush1.msra.mxu0 0.0
    %180 = vmatprep.subr.mxu0 0.0
    %181 = vmatpush1.msra.mxu0 0.0
    %182 = vmatprep.subr.mxu0 0.0
    %183 = vmatpush1.msra.mxu0 0.0
    %184 = vmatprep.subr.mxu0 0.0
    %185 = vmatpush1.msra.mxu0 0.0
    %186 = vmatprep.subr.mxu0 0.0
    %187 = vmatpush1.msra.mxu0 0.0
    %188 = vmatprep.subr.mxu0 0.0
    %189 = vmatpush1.msra.mxu0 0.0
    %190 = vmatprep.subr.mxu0 0.0
    %191 = vmatpush1.msra.mxu0 0.0
    %192 = vmatprep.subr.mxu0 0.0
    %193 = vmatpush1.msra.mxu0 0.0
    %194 = vmatprep.subr.mxu0 0.0
    %195 = vmatpush1.msra.mxu0 0.0
    %196 = vmatprep.subr.mxu0 0.0
    %197 = vmatpush1.msra.mxu0 0.0
    %198 = vmatprep.mubr.f32.mxu0 0.0
    %199 = vmatmul.mubr.f32.gmra.mrb[0].mxu0 %v132
    %v200 = vpop.f32.mrb[0].mxu0
    %v201 = vadd.f32 %v52, %v200
    %v202 = vpop.f32.mrb[0].mxu0
    %203 = vdwg.mxu0
    %s204 = scalar_lea.vmem [#allocation4], 2
    %205 = vst [vmem:[%s204] sm:$0x3] %v201
    %s206 = scalar_lea.vmem %s0, 4
    %v207 = vld [vmem:[%s206] sm:$0x3]
    %v209 = vsel %vm54, %v207, 0
    %211 = vmatprep.subr.mxu0 0.0
    %212 = vmatpush1.msra.mxu0 %v38
    %213 = vmatprep.subr.mxu0 0.0
    %214 = vmatpush1.msra.mxu0 %v39
    %215 = vmatprep.subr.mxu0 0.0
    %216 = vmatpush1.msra.mxu0 %v40
    %217 = vmatprep.subr.mxu0 0.0
    %218 = vmatpush1.msra.mxu0 %v41
    %219 = vmatprep.subr.mxu0 0.0
    %220 = vmatpush1.msra.mxu0 0.0
    %221 = vmatprep.subr.mxu0 0.0
    %222 = vmatpush1.msra.mxu0 0.0
    %223 = vmatprep.subr.mxu0 0.0
    %224 = vmatpush1.msra.mxu0 0.0
    %225 = vmatprep.subr.mxu0 0.0
    %226 = vmatpush1.msra.mxu0 0.0
    %227 = vmatprep.subr.mxu0 0.0
    %228 = vmatpush1.msra.mxu0 0.0
    %229 = vmatprep.subr.mxu0 0.0
    %230 = vmatpush1.msra.mxu0 0.0
    %231 = vmatprep.subr.mxu0 0.0
    %232 = vmatpush1.msra.mxu0 0.0
    %233 = vmatprep.subr.mxu0 0.0
    %234 = vmatpush1.msra.mxu0 0.0
    %235 = vmatprep.subr.mxu0 0.0
    %236 = vmatpush1.msra.mxu0 0.0
    %237 = vmatprep.subr.mxu0 0.0
    %238 = vmatpush1.msra.mxu0 0.0
    %239 = vmatprep.subr.mxu0 0.0
    %240 = vmatpush1.msra.mxu0 0.0
    %241 = vmatprep.subr.mxu0 0.0
    %242 = vmatpush1.msra.mxu0 0.0
    %243 = vmatprep.subr.mxu0 0.0
    %244 = vmatpush1.msra.mxu0 0.0
    %245 = vmatprep.subr.mxu0 0.0
    %246 = vmatpush1.msra.mxu0 0.0
    %247 = vmatprep.subr.mxu0 0.0
    %248 = vmatpush1.msra.mxu0 0.0
    %249 = vmatprep.subr.mxu0 0.0
    %250 = vmatpush1.msra.mxu0 0.0
    %251 = vmatprep.subr.mxu0 0.0
    %252 = vmatpush1.msra.mxu0 0.0
    %253 = vmatprep.subr.mxu0 0.0
    %254 = vmatpush1.msra.mxu0 0.0
    %255 = vmatprep.subr.mxu0 0.0
    %256 = vmatpush1.msra.mxu0 0.0
    %257 = vmatprep.subr.mxu0 0.0
    %258 = vmatpush1.msra.mxu0 0.0
    %259 = vmatprep.subr.mxu0 0.0
    %260 = vmatpush1.msra.mxu0 0.0
    %261 = vmatprep.subr.mxu0 0.0
    %262 = vmatpush1.msra.mxu0 0.0
    %263 = vmatprep.subr.mxu0 0.0
    %264 = vmatpush1.msra.mxu0 0.0
    %265 = vmatprep.subr.mxu0 0.0
    %266 = vmatpush1.msra.mxu0 0.0
    %267 = vmatprep.subr.mxu0 0.0
    %268 = vmatpush1.msra.mxu0 0.0
    %269 = vmatprep.subr.mxu0 0.0
    %270 = vmatpush1.msra.mxu0 0.0
    %271 = vmatprep.subr.mxu0 0.0
    %272 = vmatpush1.msra.mxu0 0.0
    %273 = vmatprep.subr.mxu0 0.0
    %274 = vmatpush1.msra.mxu0 0.0
    %275 = vmatprep.mubr.f32.mxu0 0.0
    %276 = vmatmul.mubr.f32.gmra.mrb[0].mxu0 %v209
    %v277 = vpop.f32.mrb[0].mxu0
    %v278 = vadd.f32 %v52, %v277
    %v279 = vpop.f32.mrb[0].mxu0
    %280 = vdwg.mxu0
    %s281 = scalar_lea.vmem [#allocation4], 4
    %282 = vst [vmem:[%s281] sm:$0x3] %v278
    %s283 = scalar_lea.vmem %s0, 6
    %v284 = vld [vmem:[%s283] sm:$0x3]
    %v286 = vsel %vm54, %v284, 0
    %288 = vmatprep.subr.mxu0 0.0
    %289 = vmatpush1.msra.mxu0 %v38
    %290 = vmatprep.subr.mxu0 0.0
    %291 = vmatpush1.msra.mxu0 %v39
    %292 = vmatprep.subr.mxu0 0.0
    %293 = vmatpush1.msra.mxu0 %v40
    %294 = vmatprep.subr.mxu0 0.0
    %295 = vmatpush1.msra.mxu0 %v41
    %296 = vmatprep.subr.mxu0 0.0
    %297 = vmatpush1.msra.mxu0 0.0
    %298 = vmatprep.subr.mxu0 0.0
    %299 = vmatpush1.msra.mxu0 0.0
    %300 = vmatprep.subr.mxu0 0.0
    %301 = vmatpush1.msra.mxu0 0.0
    %302 = vmatprep.subr.mxu0 0.0
    %303 = vmatpush1.msra.mxu0 0.0
    %304 = vmatprep.subr.mxu0 0.0
    %305 = vmatpush1.msra.mxu0 0.0
    %306 = vmatprep.subr.mxu0 0.0
    %307 = vmatpush1.msra.mxu0 0.0
    %308 = vmatprep.subr.mxu0 0.0
    %309 = vmatpush1.msra.mxu0 0.0
    %310 = vmatprep.subr.mxu0 0.0
    %311 = vmatpush1.msra.mxu0 0.0
    %312 = vmatprep.subr.mxu0 0.0
    %313 = vmatpush1.msra.mxu0 0.0
    %314 = vmatprep.subr.mxu0 0.0
    %315 = vmatpush1.msra.mxu0 0.0
    %316 = vmatprep.subr.mxu0 0.0
    %317 = vmatpush1.msra.mxu0 0.0
    %318 = vmatprep.subr.mxu0 0.0
    %319 = vmatpush1.msra.mxu0 0.0
    %320 = vmatprep.subr.mxu0 0.0
    %321 = vmatpush1.msra.mxu0 0.0
    %322 = vmatprep.subr.mxu0 0.0
    %323 = vmatpush1.msra.mxu0 0.0
    %324 = vmatprep.subr.mxu0 0.0
    %325 = vmatpush1.msra.mxu0 0.0
    %326 = vmatprep.subr.mxu0 0.0
    %327 = vmatpush1.msra.mxu0 0.0
    %328 = vmatprep.subr.mxu0 0.0
    %329 = vmatpush1.msra.mxu0 0.0
    %330 = vmatprep.subr.mxu0 0.0
    %331 = vmatpush1.msra.mxu0 0.0
    %332 = vmatprep.subr.mxu0 0.0
    %333 = vmatpush1.msra.mxu0 0.0
    %334 = vmatprep.subr.mxu0 0.0
    %335 = vmatpush1.msra.mxu0 0.0
    %336 = vmatprep.subr.mxu0 0.0
    %337 = vmatpush1.msra.mxu0 0.0
    %338 = vmatprep.subr.mxu0 0.0
    %339 = vmatpush1.msra.mxu0 0.0
    %340 = vmatprep.subr.mxu0 0.0
    %341 = vmatpush1.msra.mxu0 0.0
    %342 = vmatprep.subr.mxu0 0.0
    %343 = vmatpush1.msra.mxu0 0.0
    %344 = vmatprep.subr.mxu0 0.0
    %345 = vmatpush1.msra.mxu0 0.0
    %346 = vmatprep.subr.mxu0 0.0
    %347 = vmatpush1.msra.mxu0 0.0
    %348 = vmatprep.subr.mxu0 0.0
    %349 = vmatpush1.msra.mxu0 0.0
    %350 = vmatprep.subr.mxu0 0.0
    %351 = vmatpush1.msra.mxu0 0.0
    %352 = vmatprep.mubr.f32.mxu0 0.0
    %353 = vmatmul.mubr.f32.gmra.mrb[0].mxu0 %v286
    %v354 = vpop.f32.mrb[0].mxu0
    %v355 = vadd.f32 %v52, %v354
    %v356 = vpop.f32.mrb[0].mxu0
    %357 = vdwg.mxu0
    %s358 = scalar_lea.vmem [#allocation4], 6
    %359 = vst [vmem:[%s358] sm:$0x3] %v355
    %s360 = scalar_lea.vmem %s0, 8
    %v361 = vld [vmem:[%s360] sm:$0x3]
    %v363 = vsel %vm54, %v361, 0
    %365 = vmatprep.subr.mxu0 0.0
    %366 = vmatpush1.msra.mxu0 %v38
    %367 = vmatprep.subr.mxu0 0.0
    %368 = vmatpush1.msra.mxu0 %v39
    %369 = vmatprep.subr.mxu0 0.0
    %370 = vmatpush1.msra.mxu0 %v40
    %371 = vmatprep.subr.mxu0 0.0
    %372 = vmatpush1.msra.mxu0 %v41
    %373 = vmatprep.subr.mxu0 0.0
    %374 = vmatpush1.msra.mxu0 0.0
    %375 = vmatprep.subr.mxu0 0.0
    %376 = vmatpush1.msra.mxu0 0.0
    %377 = vmatprep.subr.mxu0 0.0
    %378 = vmatpush1.msra.mxu0 0.0
    %379 = vmatprep.subr.mxu0 0.0
    %380 = vmatpush1.msra.mxu0 0.0
    %381 = vmatprep.subr.mxu0 0.0
    %382 = vmatpush1.msra.mxu0 0.0
    %383 = vmatprep.subr.mxu0 0.0
    %384 = vmatpush1.msra.mxu0 0.0
    %385 = vmatprep.subr.mxu0 0.0
    %386 = vmatpush1.msra.mxu0 0.0
    %387 = vmatprep.subr.mxu0 0.0
    %388 = vmatpush1.msra.mxu0 0.0
    %389 = vmatprep.subr.mxu0 0.0
    %390 = vmatpush1.msra.mxu0 0.0
    %391 = vmatprep.subr.mxu0 0.0
    %392 = vmatpush1.msra.mxu0 0.0
    %393 = vmatprep.subr.mxu0 0.0
    %394 = vmatpush1.msra.mxu0 0.0
    %395 = vmatprep.subr.mxu0 0.0
    %396 = vmatpush1.msra.mxu0 0.0
    %397 = vmatprep.subr.mxu0 0.0
    %398 = vmatpush1.msra.mxu0 0.0
    %399 = vmatprep.subr.mxu0 0.0
    %400 = vmatpush1.msra.mxu0 0.0
    %401 = vmatprep.subr.mxu0 0.0
    %402 = vmatpush1.msra.mxu0 0.0
    %403 = vmatprep.subr.mxu0 0.0
    %404 = vmatpush1.msra.mxu0 0.0
    %405 = vmatprep.subr.mxu0 0.0
    %406 = vmatpush1.msra.mxu0 0.0
    %407 = vmatprep.subr.mxu0 0.0
    %408 = vmatpush1.msra.mxu0 0.0
    %409 = vmatprep.subr.mxu0 0.0
    %410 = vmatpush1.msra.mxu0 0.0
    %411 = vmatprep.subr.mxu0 0.0
    %412 = vmatpush1.msra.mxu0 0.0
    %413 = vmatprep.subr.mxu0 0.0
    %414 = vmatpush1.msra.mxu0 0.0
    %415 = vmatprep.subr.mxu0 0.0
    %416 = vmatpush1.msra.mxu0 0.0
    %417 = vmatprep.subr.mxu0 0.0
    %418 = vmatpush1.msra.mxu0 0.0
    %419 = vmatprep.subr.mxu0 0.0
    %420 = vmatpush1.msra.mxu0 0.0
    %421 = vmatprep.subr.mxu0 0.0
    %422 = vmatpush1.msra.mxu0 0.0
    %423 = vmatprep.subr.mxu0 0.0
    %424 = vmatpush1.msra.mxu0 0.0
    %425 = vmatprep.subr.mxu0 0.0
    %426 = vmatpush1.msra.mxu0 0.0
    %427 = vmatprep.subr.mxu0 0.0
    %428 = vmatpush1.msra.mxu0 0.0
    %429 = vmatprep.mubr.f32.mxu0 0.0
    %430 = vmatmul.mubr.f32.gmra.mrb[0].mxu0 %v363
    %v431 = vpop.f32.mrb[0].mxu0
    %v432 = vadd.f32 %v52, %v431
    %v433 = vpop.f32.mrb[0].mxu0
    %434 = vdwg.mxu0
    %s435 = scalar_lea.vmem [#allocation4], 8
    %436 = vst [vmem:[%s435] sm:$0x3] %v432
    %s437 = scalar_lea.vmem %s0, 10
    %v438 = vld [vmem:[%s437] sm:$0x3]
    %v440 = vsel %vm54, %v438, 0
    %442 = vmatprep.subr.mxu0 0.0
    %443 = vmatpush1.msra.mxu0 %v38
    %444 = vmatprep.subr.mxu0 0.0
    %445 = vmatpush1.msra.mxu0 %v39
    %446 = vmatprep.subr.mxu0 0.0
    %447 = vmatpush1.msra.mxu0 %v40
    %448 = vmatprep.subr.mxu0 0.0
    %449 = vmatpush1.msra.mxu0 %v41
    %450 = vmatprep.subr.mxu0 0.0
    %451 = vmatpush1.msra.mxu0 0.0
    %452 = vmatprep.subr.mxu0 0.0
    %453 = vmatpush1.msra.mxu0 0.0
    %454 = vmatprep.subr.mxu0 0.0
    %455 = vmatpush1.msra.mxu0 0.0
    %456 = vmatprep.subr.mxu0 0.0
    %457 = vmatpush1.msra.mxu0 0.0
    %458 = vmatprep.subr.mxu0 0.0
    %459 = vmatpush1.msra.mxu0 0.0
    %460 = vmatprep.subr.mxu0 0.0
    %461 = vmatpush1.msra.mxu0 0.0
    %462 = vmatprep.subr.mxu0 0.0
    %463 = vmatpush1.msra.mxu0 0.0
    %464 = vmatprep.subr.mxu0 0.0
    %465 = vmatpush1.msra.mxu0 0.0
    %466 = vmatprep.subr.mxu0 0.0
    %467 = vmatpush1.msra.mxu0 0.0
    %468 = vmatprep.subr.mxu0 0.0
    %469 = vmatpush1.msra.mxu0 0.0
    %470 = vmatprep.subr.mxu0 0.0
    %471 = vmatpush1.msra.mxu0 0.0
    %472 = vmatprep.subr.mxu0 0.0
    %473 = vmatpush1.msra.mxu0 0.0
    %474 = vmatprep.subr.mxu0 0.0
    %475 = vmatpush1.msra.mxu0 0.0
    %476 = vmatprep.subr.mxu0 0.0
    %477 = vmatpush1.msra.mxu0 0.0
    %478 = vmatprep.subr.mxu0 0.0
    %479 = vmatpush1.msra.mxu0 0.0
    %480 = vmatprep.subr.mxu0 0.0
    %481 = vmatpush1.msra.mxu0 0.0
    %482 = vmatprep.subr.mxu0 0.0
    %483 = vmatpush1.msra.mxu0 0.0
    %484 = vmatprep.subr.mxu0 0.0
    %485 = vmatpush1.msra.mxu0 0.0
    %486 = vmatprep.subr.mxu0 0.0
    %487 = vmatpush1.msra.mxu0 0.0
    %488 = vmatprep.subr.mxu0 0.0
    %489 = vmatpush1.msra.mxu0 0.0
    %490 = vmatprep.subr.mxu0 0.0
    %491 = vmatpush1.msra.mxu0 0.0
    %492 = vmatprep.subr.mxu0 0.0
    %493 = vmatpush1.msra.mxu0 0.0
    %494 = vmatprep.subr.mxu0 0.0
    %495 = vmatpush1.msra.mxu0 0.0
    %496 = vmatprep.subr.mxu0 0.0
    %497 = vmatpush1.msra.mxu0 0.0
    %498 = vmatprep.subr.mxu0 0.0
    %499 = vmatpush1.msra.mxu0 0.0
    %500 = vmatprep.subr.mxu0 0.0
    %501 = vmatpush1.msra.mxu0 0.0
    %502 = vmatprep.subr.mxu0 0.0
    %503 = vmatpush1.msra.mxu0 0.0
    %504 = vmatprep.subr.mxu0 0.0
    %505 = vmatpush1.msra.mxu0 0.0
    %506 = vmatprep.mubr.f32.mxu0 0.0
    %507 = vmatmul.mubr.f32.gmra.mrb[0].mxu0 %v440
    %v508 = vpop.f32.mrb[0].mxu0
    %v509 = vadd.f32 %v52, %v508
    %v510 = vpop.f32.mrb[0].mxu0
    %511 = vdwg.mxu0
    %s512 = scalar_lea.vmem [#allocation4], 10
    %513 = vst [vmem:[%s512] sm:$0x3] %v509
    %s514 = scalar_lea.vmem %s0, 12
    %v515 = vld [vmem:[%s514] sm:$0x3]
    %v517 = vsel %vm54, %v515, 0
    %519 = vmatprep.subr.mxu0 0.0
    %520 = vmatpush1.msra.mxu0 %v38
    %521 = vmatprep.subr.mxu0 0.0
    %522 = vmatpush1.msra.mxu0 %v39
    %523 = vmatprep.subr.mxu0 0.0
    %524 = vmatpush1.msra.mxu0 %v40
    %525 = vmatprep.subr.mxu0 0.0
    %526 = vmatpush1.msra.mxu0 %v41
    %527 = vmatprep.subr.mxu0 0.0
    %528 = vmatpush1.msra.mxu0 0.0
    %529 = vmatprep.subr.mxu0 0.0
    %530 = vmatpush1.msra.mxu0 0.0
    %531 = vmatprep.subr.mxu0 0.0
    %532 = vmatpush1.msra.mxu0 0.0
    %533 = vmatprep.subr.mxu0 0.0
    %534 = vmatpush1.msra.mxu0 0.0
    %535 = vmatprep.subr.mxu0 0.0
    %536 = vmatpush1.msra.mxu0 0.0
    %537 = vmatprep.subr.mxu0 0.0
    %538 = vmatpush1.msra.mxu0 0.0
    %539 = vmatprep.subr.mxu0 0.0
    %540 = vmatpush1.msra.mxu0 0.0
    %541 = vmatprep.subr.mxu0 0.0
    %542 = vmatpush1.msra.mxu0 0.0
    %543 = vmatprep.subr.mxu0 0.0
    %544 = vmatpush1.msra.mxu0 0.0
    %545 = vmatprep.subr.mxu0 0.0
    %546 = vmatpush1.msra.mxu0 0.0
    %547 = vmatprep.subr.mxu0 0.0
    %548 = vmatpush1.msra.mxu0 0.0
    %549 = vmatprep.subr.mxu0 0.0
    %550 = vmatpush1.msra.mxu0 0.0
    %551 = vmatprep.subr.mxu0 0.0
    %552 = vmatpush1.msra.mxu0 0.0
    %553 = vmatprep.subr.mxu0 0.0
    %554 = vmatpush1.msra.mxu0 0.0
    %555 = vmatprep.subr.mxu0 0.0
    %556 = vmatpush1.msra.mxu0 0.0
    %557 = vmatprep.subr.mxu0 0.0
    %558 = vmatpush1.msra.mxu0 0.0
    %559 = vmatprep.subr.mxu0 0.0
    %560 = vmatpush1.msra.mxu0 0.0
    %561 = vmatprep.subr.mxu0 0.0
    %562 = vmatpush1.msra.mxu0 0.0
    %563 = vmatprep.subr.mxu0 0.0
    %564 = vmatpush1.msra.mxu0 0.0
    %565 = vmatprep.subr.mxu0 0.0
    %566 = vmatpush1.msra.mxu0 0.0
    %567 = vmatprep.subr.mxu0 0.0
    %568 = vmatpush1.msra.mxu0 0.0
    %569 = vmatprep.subr.mxu0 0.0
    %570 = vmatpush1.msra.mxu0 0.0
    %571 = vmatprep.subr.mxu0 0.0
    %572 = vmatpush1.msra.mxu0 0.0
    %573 = vmatprep.subr.mxu0 0.0
    %574 = vmatpush1.msra.mxu0 0.0
    %575 = vmatprep.subr.mxu0 0.0
    %576 = vmatpush1.msra.mxu0 0.0
    %577 = vmatprep.subr.mxu0 0.0
    %578 = vmatpush1.msra.mxu0 0.0
    %579 = vmatprep.subr.mxu0 0.0
    %580 = vmatpush1.msra.mxu0 0.0
    %581 = vmatprep.subr.mxu0 0.0
    %582 = vmatpush1.msra.mxu0 0.0
    %583 = vmatprep.mubr.f32.mxu0 0.0
    %584 = vmatmul.mubr.f32.gmra.mrb[0].mxu0 %v517
    %v585 = vpop.f32.mrb[0].mxu0
    %v586 = vadd.f32 %v52, %v585
    %v587 = vpop.f32.mrb[0].mxu0
    %588 = vdwg.mxu0
    %s589 = scalar_lea.vmem [#allocation4], 12
    %590 = vst [vmem:[%s589] sm:$0x3] %v586
    %s591 = scalar_lea.vmem %s0, 14
    %v592 = vld [vmem:[%s591] sm:$0x3]
    %v594 = vsel %vm54, %v592, 0
    %596 = vmatprep.subr.mxu0 0.0
    %597 = vmatpush1.msra.mxu0 %v38
    %598 = vmatprep.subr.mxu0 0.0
    %599 = vmatpush1.msra.mxu0 %v39
    %600 = vmatprep.subr.mxu0 0.0
    %601 = vmatpush1.msra.mxu0 %v40
    %602 = vmatprep.subr.mxu0 0.0
    %603 = vmatpush1.msra.mxu0 %v41
    %604 = vmatprep.subr.mxu0 0.0
    %605 = vmatpush1.msra.mxu0 0.0
    %606 = vmatprep.subr.mxu0 0.0
    %607 = vmatpush1.msra.mxu0 0.0
    %608 = vmatprep.subr.mxu0 0.0
    %609 = vmatpush1.msra.mxu0 0.0
    %610 = vmatprep.subr.mxu0 0.0
    %611 = vmatpush1.msra.mxu0 0.0
    %612 = vmatprep.subr.mxu0 0.0
    %613 = vmatpush1.msra.mxu0 0.0
    %614 = vmatprep.subr.mxu0 0.0
    %615 = vmatpush1.msra.mxu0 0.0
    %616 = vmatprep.subr.mxu0 0.0
    %617 = vmatpush1.msra.mxu0 0.0
    %618 = vmatprep.subr.mxu0 0.0
    %619 = vmatpush1.msra.mxu0 0.0
    %620 = vmatprep.subr.mxu0 0.0
    %621 = vmatpush1.msra.mxu0 0.0
    %622 = vmatprep.subr.mxu0 0.0
    %623 = vmatpush1.msra.mxu0 0.0
    %624 = vmatprep.subr.mxu0 0.0
    %625 = vmatpush1.msra.mxu0 0.0
    %626 = vmatprep.subr.mxu0 0.0
    %627 = vmatpush1.msra.mxu0 0.0
    %628 = vmatprep.subr.mxu0 0.0
    %629 = vmatpush1.msra.mxu0 0.0
    %630 = vmatprep.subr.mxu0 0.0
    %631 = vmatpush1.msra.mxu0 0.0
    %632 = vmatprep.subr.mxu0 0.0
    %633 = vmatpush1.msra.mxu0 0.0
    %634 = vmatprep.subr.mxu0 0.0
    %635 = vmatpush1.msra.mxu0 0.0
    %636 = vmatprep.subr.mxu0 0.0
    %637 = vmatpush1.msra.mxu0 0.0
    %638 = vmatprep.subr.mxu0 0.0
    %639 = vmatpush1.msra.mxu0 0.0
    %640 = vmatprep.subr.mxu0 0.0
    %641 = vmatpush1.msra.mxu0 0.0
    %642 = vmatprep.subr.mxu0 0.0
    %643 = vmatpush1.msra.mxu0 0.0
    %644 = vmatprep.subr.mxu0 0.0
    %645 = vmatpush1.msra.mxu0 0.0
    %646 = vmatprep.subr.mxu0 0.0
    %647 = vmatpush1.msra.mxu0 0.0
    %648 = vmatprep.subr.mxu0 0.0
    %649 = vmatpush1.msra.mxu0 0.0
    %650 = vmatprep.subr.mxu0 0.0
    %651 = vmatpush1.msra.mxu0 0.0
    %652 = vmatprep.subr.mxu0 0.0
    %653 = vmatpush1.msra.mxu0 0.0
    %654 = vmatprep.subr.mxu0 0.0
    %655 = vmatpush1.msra.mxu0 0.0
    %656 = vmatprep.subr.mxu0 0.0
    %657 = vmatpush1.msra.mxu0 0.0
    %658 = vmatprep.subr.mxu0 0.0
    %659 = vmatpush1.msra.mxu0 0.0
    %660 = vmatprep.mubr.f32.mxu0 0.0
    %661 = vmatmul.mubr.f32.gmra.mrb[0].mxu0 %v594
    %v662 = vpop.f32.mrb[0].mxu0
    %v663 = vadd.f32 %v52, %v662
    %v664 = vpop.f32.mrb[0].mxu0
    %665 = vdwg.mxu0
    %s666 = scalar_lea.vmem [#allocation4], 14
    %667 = vst [vmem:[%s666] sm:$0x3] %v663
    %v668 = vld [vmem:[#allocation2] sm:$0x3]
    %v669 = vld [vmem:[#allocation3] sm:$0x3]
    %v670 = vld [vmem:[#allocation4] sm:$0x3]
    %v672 = vsel %vm54, %v668, 0
    %674 = vmatprep.subr.mxu0 0.0
    %675 = vmatpush1.msra.mxu0 %v42
    %676 = vmatprep.subr.mxu0 0.0
    %677 = vmatpush1.msra.mxu0 %v43
    %678 = vmatprep.subr.mxu0 0.0
    %679 = vmatpush1.msra.mxu0 %v44
    %680 = vmatprep.subr.mxu0 0.0
    %681 = vmatpush1.msra.mxu0 %v45
    %682 = vmatprep.subr.mxu0 0.0
    %683 = vmatpush1.msra.mxu0 0.0
    %684 = vmatprep.subr.mxu0 0.0
    %685 = vmatpush1.msra.mxu0 0.0
    %686 = vmatprep.subr.mxu0 0.0
    %687 = vmatpush1.msra.mxu0 0.0
    %688 = vmatprep.subr.mxu0 0.0
    %689 = vmatpush1.msra.mxu0 0.0
    %690 = vmatprep.subr.mxu0 0.0
    %691 = vmatpush1.msra.mxu0 0.0
    %692 = vmatprep.subr.mxu0 0.0
    %693 = vmatpush1.msra.mxu0 0.0
    %694 = vmatprep.subr.mxu0 0.0
    %695 = vmatpush1.msra.mxu0 0.0
    %696 = vmatprep.subr.mxu0 0.0
    %697 = vmatpush1.msra.mxu0 0.0
    %698 = vmatprep.subr.mxu0 0.0
    %699 = vmatpush1.msra.mxu0 0.0
    %700 = vmatprep.subr.mxu0 0.0
    %701 = vmatpush1.msra.mxu0 0.0
    %702 = vmatprep.subr.mxu0 0.0
    %703 = vmatpush1.msra.mxu0 0.0
    %704 = vmatprep.subr.mxu0 0.0
    %705 = vmatpush1.msra.mxu0 0.0
    %706 = vmatprep.subr.mxu0 0.0
    %707 = vmatpush1.msra.mxu0 0.0
    %708 = vmatprep.subr.mxu0 0.0
    %709 = vmatpush1.msra.mxu0 0.0
    %710 = vmatprep.subr.mxu0 0.0
    %711 = vmatpush1.msra.mxu0 0.0
    %712 = vmatprep.subr.mxu0 0.0
    %713 = vmatpush1.msra.mxu0 0.0
    %714 = vmatprep.subr.mxu0 0.0
    %715 = vmatpush1.msra.mxu0 0.0
    %716 = vmatprep.subr.mxu0 0.0
    %717 = vmatpush1.msra.mxu0 0.0
    %718 = vmatprep.subr.mxu0 0.0
    %719 = vmatpush1.msra.mxu0 0.0
    %720 = vmatprep.subr.mxu0 0.0
    %721 = vmatpush1.msra.mxu0 0.0
    %722 = vmatprep.subr.mxu0 0.0
    %723 = vmatpush1.msra.mxu0 0.0
    %724 = vmatprep.subr.mxu0 0.0
    %725 = vmatpush1.msra.mxu0 0.0
    %726 = vmatprep.subr.mxu0 0.0
    %727 = vmatpush1.msra.mxu0 0.0
    %728 = vmatprep.subr.mxu0 0.0
    %729 = vmatpush1.msra.mxu0 0.0
    %730 = vmatprep.subr.mxu0 0.0
    %731 = vmatpush1.msra.mxu0 0.0
    %732 = vmatprep.subr.mxu0 0.0
    %733 = vmatpush1.msra.mxu0 0.0
    %734 = vmatprep.subr.mxu0 0.0
    %735 = vmatpush1.msra.mxu0 0.0
    %736 = vmatprep.subr.mxu0 0.0
    %737 = vmatpush1.msra.mxu0 0.0
    %738 = vmatprep.mubr.f32.mxu0 0.0
    %739 = vmatmul.mubr.f32.gmra.mrb[0].mxu0 %v672
    %v740 = vpop.f32.mrb[0].mxu0
    %v741 = vadd.f32 0.0, %v740
    %v742 = vpop.f32.mrb[0].mxu0
    %743 = vdwg.mxu0
    %v744 = vadd.f32 %v670, %v741
    %v745 = vmul.f32 %v744, 0.5
    %v746 = vtanh.pop %v745
    %v747 = vmul.f32 %v746, 0.5
    %v748 = vadd.f32 %v747, 0.5
    %v749 = vtanh.pop %v744
    %751 = vrot.lane.b32.xlu0 %v669, 32
    %v752 = vpop.permute.xlu0 %751
    %v754 = vmul.f32 %v748, %v752
    %756 = vrot.lane.b32.xlu0 %v749, 64
    %v757 = vpop.permute.xlu0 %756
    %v759 = vmul.f32 %v748, %v757
    %761 = vrot.lane.b32.xlu0 %v759, 32
    %v762 = vpop.permute.xlu0 %761
    %v764 = vadd.f32 %v754, %v762
    %v765 = vtanh.pop %v764
    %767 = vrot.lane.b32.xlu0 %v765, 64
    %v768 = vpop.permute.xlu0 %767
    %v770 = vmul.f32 %v748, %v768
    %772 = vrot.lane.b32.xlu0 %v770, 32
    %v773 = vpop.permute.xlu0 %772
    %vm775 = vcmask 254976
    %776 = vst.msk [vmem:[%s4] sm:$0x3] %vm775, %v773
    %v777 = vld [vmem:[%s204] sm:$0x3]
    %v778 = vsel %vm54, %v773, 0
    %780 = vmatprep.subr.mxu0 0.0
    %781 = vmatpush1.msra.mxu0 %v42
    %782 = vmatprep.subr.mxu0 0.0
    %783 = vmatpush1.msra.mxu0 %v43
    %784 = vmatprep.subr.mxu0 0.0
    %785 = vmatpush1.msra.mxu0 %v44
    %786 = vmatprep.subr.mxu0 0.0
    %787 = vmatpush1.msra.mxu0 %v45
    %788 = vmatprep.subr.mxu0 0.0
    %789 = vmatpush1.msra.mxu0 0.0
    %790 = vmatprep.subr.mxu0 0.0
    %791 = vmatpush1.msra.mxu0 0.0
    %792 = vmatprep.subr.mxu0 0.0
    %793 = vmatpush1.msra.mxu0 0.0
    %794 = vmatprep.subr.mxu0 0.0
    %795 = vmatpush1.msra.mxu0 0.0
    %796 = vmatprep.subr.mxu0 0.0
    %797 = vmatpush1.msra.mxu0 0.0
    %798 = vmatprep.subr.mxu0 0.0
    %799 = vmatpush1.msra.mxu0 0.0
    %800 = vmatprep.subr.mxu0 0.0
    %801 = vmatpush1.msra.mxu0 0.0
    %802 = vmatprep.subr.mxu0 0.0
    %803 = vmatpush1.msra.mxu0 0.0
    %804 = vmatprep.subr.mxu0 0.0
    %805 = vmatpush1.msra.mxu0 0.0
    %806 = vmatprep.subr.mxu0 0.0
    %807 = vmatpush1.msra.mxu0 0.0
    %808 = vmatprep.subr.mxu0 0.0
    %809 = vmatpush1.msra.mxu0 0.0
    %810 = vmatprep.subr.mxu0 0.0
    %811 = vmatpush1.msra.mxu0 0.0
    %812 = vmatprep.subr.mxu0 0.0
    %813 = vmatpush1.msra.mxu0 0.0
    %814 = vmatprep.subr.mxu0 0.0
    %815 = vmatpush1.msra.mxu0 0.0
    %816 = vmatprep.subr.mxu0 0.0
    %817 = vmatpush1.msra.mxu0 0.0
    %818 = vmatprep.subr.mxu0 0.0
    %819 = vmatpush1.msra.mxu0 0.0
    %820 = vmatprep.subr.mxu0 0.0
    %821 = vmatpush1.msra.mxu0 0.0
    %822 = vmatprep.subr.mxu0 0.0
    %823 = vmatpush1.msra.mxu0 0.0
    %824 = vmatprep.subr.mxu0 0.0
    %825 = vmatpush1.msra.mxu0 0.0
    %826 = vmatprep.subr.mxu0 0.0
    %827 = vmatpush1.msra.mxu0 0.0
    %828 = vmatprep.subr.mxu0 0.0
    %829 = vmatpush1.msra.mxu0 0.0
    %830 = vmatprep.subr.mxu0 0.0
    %831 = vmatpush1.msra.mxu0 0.0
    %832 = vmatprep.subr.mxu0 0.0
    %833 = vmatpush1.msra.mxu0 0.0
    %834 = vmatprep.subr.mxu0 0.0
    %835 = vmatpush1.msra.mxu0 0.0
    %836 = vmatprep.subr.mxu0 0.0
    %837 = vmatpush1.msra.mxu0 0.0
    %838 = vmatprep.subr.mxu0 0.0
    %839 = vmatpush1.msra.mxu0 0.0
    %840 = vmatprep.subr.mxu0 0.0
    %841 = vmatpush1.msra.mxu0 0.0
    %842 = vmatprep.subr.mxu0 0.0
    %843 = vmatpush1.msra.mxu0 0.0
    %844 = vmatprep.mubr.f32.mxu0 0.0
    %845 = vmatmul.mubr.f32.gmra.mrb[0].mxu0 %v778
    %v846 = vpop.f32.mrb[0].mxu0
    %v847 = vadd.f32 0.0, %v846
    %v848 = vpop.f32.mrb[0].mxu0
    %849 = vdwg.mxu0
    %v850 = vadd.f32 %v777, %v847
    %v851 = vmul.f32 %v850, 0.5
    %v852 = vtanh.pop %v851
    %v853 = vmul.f32 %v852, 0.5
    %v854 = vadd.f32 %v853, 0.5
    %v855 = vtanh.pop %v850
    %v856 = vmul.f32 %v854, %v764
    %858 = vrot.lane.b32.xlu0 %v855, 64
    %v859 = vpop.permute.xlu0 %858
    %v861 = vmul.f32 %v854, %v859
    %863 = vrot.lane.b32.xlu0 %v861, 32
    %v864 = vpop.permute.xlu0 %863
    %v866 = vadd.f32 %v856, %v864
    %v867 = vtanh.pop %v866
    %869 = vrot.lane.b32.xlu0 %v867, 64
    %v870 = vpop.permute.xlu0 %869
    %v872 = vmul.f32 %v854, %v870
    %874 = vrot.lane.b32.xlu0 %v872, 32
    %v875 = vpop.permute.xlu0 %874
    %s877 = scalar_lea.vmem %s4, 2
    %878 = vst.msk [vmem:[%s877] sm:$0x3] %vm775, %v875
    %v879 = vld [vmem:[%s281] sm:$0x3]
    %v880 = vsel %vm54, %v875, 0
    %882 = vmatprep.subr.mxu0 0.0
    %883 = vmatpush1.msra.mxu0 %v42
    %884 = vmatprep.subr.mxu0 0.0
    %885 = vmatpush1.msra.mxu0 %v43
    %886 = vmatprep.subr.mxu0 0.0
    %887 = vmatpush1.msra.mxu0 %v44
    %888 = vmatprep.subr.mxu0 0.0
    %889 = vmatpush1.msra.mxu0 %v45
    %890 = vmatprep.subr.mxu0 0.0
    %891 = vmatpush1.msra.mxu0 0.0
    %892 = vmatprep.subr.mxu0 0.0
    %893 = vmatpush1.msra.mxu0 0.0
    %894 = vmatprep.subr.mxu0 0.0
    %895 = vmatpush1.msra.mxu0 0.0
    %896 = vmatprep.subr.mxu0 0.0
    %897 = vmatpush1.msra.mxu0 0.0
    %898 = vmatprep.subr.mxu0 0.0
    %899 = vmatpush1.msra.mxu0 0.0
    %900 = vmatprep.subr.mxu0 0.0
    %901 = vmatpush1.msra.mxu0 0.0
    %902 = vmatprep.subr.mxu0 0.0
    %903 = vmatpush1.msra.mxu0 0.0
    %904 = vmatprep.subr.mxu0 0.0
    %905 = vmatpush1.msra.mxu0 0.0
    %906 = vmatprep.subr.mxu0 0.0
    %907 = vmatpush1.msra.mxu0 0.0
    %908 = vmatprep.subr.mxu0 0.0
    %909 = vmatpush1.msra.mxu0 0.0
    %910 = vmatprep.subr.mxu0 0.0
    %911 = vmatpush1.msra.mxu0 0.0
    %912 = vmatprep.subr.mxu0 0.0
    %913 = vmatpush1.msra.mxu0 0.0
    %914 = vmatprep.subr.mxu0 0.0
    %915 = vmatpush1.msra.mxu0 0.0
    %916 = vmatprep.subr.mxu0 0.0
    %917 = vmatpush1.msra.mxu0 0.0
    %918 = vmatprep.subr.mxu0 0.0
    %919 = vmatpush1.msra.mxu0 0.0
    %920 = vmatprep.subr.mxu0 0.0
    %921 = vmatpush1.msra.mxu0 0.0
    %922 = vmatprep.subr.mxu0 0.0
    %923 = vmatpush1.msra.mxu0 0.0
    %924 = vmatprep.subr.mxu0 0.0
    %925 = vmatpush1.msra.mxu0 0.0
    %926 = vmatprep.subr.mxu0 0.0
    %927 = vmatpush1.msra.mxu0 0.0
    %928 = vmatprep.subr.mxu0 0.0
    %929 = vmatpush1.msra.mxu0 0.0
    %930 = vmatprep.subr.mxu0 0.0
    %931 = vmatpush1.msra.mxu0 0.0
    %932 = vmatprep.subr.mxu0 0.0
    %933 = vmatpush1.msra.mxu0 0.0
    %934 = vmatprep.subr.mxu0 0.0
    %935 = vmatpush1.msra.mxu0 0.0
    %936 = vmatprep.subr.mxu0 0.0
    %937 = vmatpush1.msra.mxu0 0.0
    %938 = vmatprep.subr.mxu0 0.0
    %939 = vmatpush1.msra.mxu0 0.0
    %940 = vmatprep.subr.mxu0 0.0
    %941 = vmatpush1.msra.mxu0 0.0
    %942 = vmatprep.subr.mxu0 0.0
    %943 = vmatpush1.msra.mxu0 0.0
    %944 = vmatprep.subr.mxu0 0.0
    %945 = vmatpush1.msra.mxu0 0.0
    %946 = vmatprep.mubr.f32.mxu0 0.0
    %947 = vmatmul.mubr.f32.gmra.mrb[0].mxu0 %v880
    %v948 = vpop.f32.mrb[0].mxu0
    %v949 = vadd.f32 0.0, %v948
    %v950 = vpop.f32.mrb[0].mxu0
    %951 = vdwg.mxu0
    %v952 = vadd.f32 %v879, %v949
    %v953 = vmul.f32 %v952, 0.5
    %v954 = vtanh.pop %v953
    %v955 = vmul.f32 %v954, 0.5
    %v956 = vadd.f32 %v955, 0.5
    %v957 = vtanh.pop %v952
    %v958 = vmul.f32 %v956, %v866
    %960 = vrot.lane.b32.xlu0 %v957, 64
    %v961 = vpop.permute.xlu0 %960
    %v963 = vmul.f32 %v956, %v961
    %965 = vrot.lane.b32.xlu0 %v963, 32
    %v966 = vpop.permute.xlu0 %965
    %v968 = vadd.f32 %v958, %v966
    %v969 = vtanh.pop %v968
    %971 = vrot.lane.b32.xlu0 %v969, 64
    %v972 = vpop.permute.xlu0 %971
    %v974 = vmul.f32 %v956, %v972
    %976 = vrot.lane.b32.xlu0 %v974, 32
    %v977 = vpop.permute.xlu0 %976
    %s979 = scalar_lea.vmem %s4, 4
    %980 = vst.msk [vmem:[%s979] sm:$0x3] %vm775, %v977
    %v981 = vld [vmem:[%s358] sm:$0x3]
    %v982 = vsel %vm54, %v977, 0
    %984 = vmatprep.subr.mxu0 0.0
    %985 = vmatpush1.msra.mxu0 %v42
    %986 = vmatprep.subr.mxu0 0.0
    %987 = vmatpush1.msra.mxu0 %v43
    %988 = vmatprep.subr.mxu0 0.0
    %989 = vmatpush1.msra.mxu0 %v44
    %990 = vmatprep.subr.mxu0 0.0
    %991 = vmatpush1.msra.mxu0 %v45
    %992 = vmatprep.subr.mxu0 0.0
    %993 = vmatpush1.msra.mxu0 0.0
    %994 = vmatprep.subr.mxu0 0.0
    %995 = vmatpush1.msra.mxu0 0.0
    %996 = vmatprep.subr.mxu0 0.0
    %997 = vmatpush1.msra.mxu0 0.0
    %998 = vmatprep.subr.mxu0 0.0
    %999 = vmatpush1.msra.mxu0 0.0
    %1000 = vmatprep.subr.mxu0 0.0
    %1001 = vmatpush1.msra.mxu0 0.0
    %1002 = vmatprep.subr.mxu0 0.0
    %1003 = vmatpush1.msra.mxu0 0.0
    %1004 = vmatprep.subr.mxu0 0.0
    %1005 = vmatpush1.msra.mxu0 0.0
    %1006 = vmatprep.subr.mxu0 0.0
    %1007 = vmatpush1.msra.mxu0 0.0
    %1008 = vmatprep.subr.mxu0 0.0
    %1009 = vmatpush1.msra.mxu0 0.0
    %1010 = vmatprep.subr.mxu0 0.0
    %1011 = vmatpush1.msra.mxu0 0.0
    %1012 = vmatprep.subr.mxu0 0.0
    %1013 = vmatpush1.msra.mxu0 0.0
    %1014 = vmatprep.subr.mxu0 0.0
    %1015 = vmatpush1.msra.mxu0 0.0
    %1016 = vmatprep.subr.mxu0 0.0
    %1017 = vmatpush1.msra.mxu0 0.0
    %1018 = vmatprep.subr.mxu0 0.0
    %1019 = vmatpush1.msra.mxu0 0.0
    %1020 = vmatprep.subr.mxu0 0.0
    %1021 = vmatpush1.msra.mxu0 0.0
    %1022 = vmatprep.subr.mxu0 0.0
    %1023 = vmatpush1.msra.mxu0 0.0
    %1024 = vmatprep.subr.mxu0 0.0
    %1025 = vmatpush1.msra.mxu0 0.0
    %1026 = vmatprep.subr.mxu0 0.0
    %1027 = vmatpush1.msra.mxu0 0.0
    %1028 = vmatprep.subr.mxu0 0.0
    %1029 = vmatpush1.msra.mxu0 0.0
    %1030 = vmatprep.subr.mxu0 0.0
    %1031 = vmatpush1.msra.mxu0 0.0
    %1032 = vmatprep.subr.mxu0 0.0
    %1033 = vmatpush1.msra.mxu0 0.0
    %1034 = vmatprep.subr.mxu0 0.0
    %1035 = vmatpush1.msra.mxu0 0.0
    %1036 = vmatprep.subr.mxu0 0.0
    %1037 = vmatpush1.msra.mxu0 0.0
    %1038 = vmatprep.subr.mxu0 0.0
    %1039 = vmatpush1.msra.mxu0 0.0
    %1040 = vmatprep.subr.mxu0 0.0
    %1041 = vmatpush1.msra.mxu0 0.0
    %1042 = vmatprep.subr.mxu0 0.0
    %1043 = vmatpush1.msra.mxu0 0.0
    %1044 = vmatprep.subr.mxu0 0.0
    %1045 = vmatpush1.msra.mxu0 0.0
    %1046 = vmatprep.subr.mxu0 0.0
    %1047 = vmatpush1.msra.mxu0 0.0
    %1048 = vmatprep.mubr.f32.mxu0 0.0
    %1049 = vmatmul.mubr.f32.gmra.mrb[0].mxu0 %v982
    %v1050 = vpop.f32.mrb[0].mxu0
    %v1051 = vadd.f32 0.0, %v1050
    %v1052 = vpop.f32.mrb[0].mxu0
    %1053 = vdwg.mxu0
    %v1054 = vadd.f32 %v981, %v1051
    %v1055 = vmul.f32 %v1054, 0.5
    %v1056 = vtanh.pop %v1055
    %v1057 = vmul.f32 %v1056, 0.5
    %v1058 = vadd.f32 %v1057, 0.5
    %v1059 = vtanh.pop %v1054
    %v1060 = vmul.f32 %v1058, %v968
    %1062 = vrot.lane.b32.xlu0 %v1059, 64
    %v1063 = vpop.permute.xlu0 %1062
    %v1065 = vmul.f32 %v1058, %v1063
    %1067 = vrot.lane.b32.xlu0 %v1065, 32
    %v1068 = vpop.permute.xlu0 %1067
    %v1070 = vadd.f32 %v1060, %v1068
    %v1071 = vtanh.pop %v1070
    %1073 = vrot.lane.b32.xlu0 %v1071, 64
    %v1074 = vpop.permute.xlu0 %1073
    %v1076 = vmul.f32 %v1058, %v1074
    %1078 = vrot.lane.b32.xlu0 %v1076, 32
    %v1079 = vpop.permute.xlu0 %1078
    %s1081 = scalar_lea.vmem %s4, 6
    %1082 = vst.msk [vmem:[%s1081] sm:$0x3] %vm775, %v1079
    %v1083 = vld [vmem:[%s435] sm:$0x3]
    %v1084 = vsel %vm54, %v1079, 0
    %1086 = vmatprep.subr.mxu0 0.0
    %1087 = vmatpush1.msra.mxu0 %v42
    %1088 = vmatprep.subr.mxu0 0.0
    %1089 = vmatpush1.msra.mxu0 %v43
    %1090 = vmatprep.subr.mxu0 0.0
    %1091 = vmatpush1.msra.mxu0 %v44
    %1092 = vmatprep.subr.mxu0 0.0
    %1093 = vmatpush1.msra.mxu0 %v45
    %1094 = vmatprep.subr.mxu0 0.0
    %1095 = vmatpush1.msra.mxu0 0.0
    %1096 = vmatprep.subr.mxu0 0.0
    %1097 = vmatpush1.msra.mxu0 0.0
    %1098 = vmatprep.subr.mxu0 0.0
    %1099 = vmatpush1.msra.mxu0 0.0
    %1100 = vmatprep.subr.mxu0 0.0
    %1101 = vmatpush1.msra.mxu0 0.0
    %1102 = vmatprep.subr.mxu0 0.0
    %1103 = vmatpush1.msra.mxu0 0.0
    %1104 = vmatprep.subr.mxu0 0.0
    %1105 = vmatpush1.msra.mxu0 0.0
    %1106 = vmatprep.subr.mxu0 0.0
    %1107 = vmatpush1.msra.mxu0 0.0
    %1108 = vmatprep.subr.mxu0 0.0
    %1109 = vmatpush1.msra.mxu0 0.0
    %1110 = vmatprep.subr.mxu0 0.0
    %1111 = vmatpush1.msra.mxu0 0.0
    %1112 = vmatprep.subr.mxu0 0.0
    %1113 = vmatpush1.msra.mxu0 0.0
    %1114 = vmatprep.subr.mxu0 0.0
    %1115 = vmatpush1.msra.mxu0 0.0
    %1116 = vmatprep.subr.mxu0 0.0
    %1117 = vmatpush1.msra.mxu0 0.0
    %1118 = vmatprep.subr.mxu0 0.0
    %1119 = vmatpush1.msra.mxu0 0.0
    %1120 = vmatprep.subr.mxu0 0.0
    %1121 = vmatpush1.msra.mxu0 0.0
    %1122 = vmatprep.subr.mxu0 0.0
    %1123 = vmatpush1.msra.mxu0 0.0
    %1124 = vmatprep.subr.mxu0 0.0
    %1125 = vmatpush1.msra.mxu0 0.0
    %1126 = vmatprep.subr.mxu0 0.0
    %1127 = vmatpush1.msra.mxu0 0.0
    %1128 = vmatprep.subr.mxu0 0.0
    %1129 = vmatpush1.msra.mxu0 0.0
    %1130 = vmatprep.subr.mxu0 0.0
    %1131 = vmatpush1.msra.mxu0 0.0
    %1132 = vmatprep.subr.mxu0 0.0
    %1133 = vmatpush1.msra.mxu0 0.0
    %1134 = vmatprep.subr.mxu0 0.0
    %1135 = vmatpush1.msra.mxu0 0.0
    %1136 = vmatprep.subr.mxu0 0.0
    %1137 = vmatpush1.msra.mxu0 0.0
    %1138 = vmatprep.subr.mxu0 0.0
    %1139 = vmatpush1.msra.mxu0 0.0
    %1140 = vmatprep.subr.mxu0 0.0
    %1141 = vmatpush1.msra.mxu0 0.0
    %1142 = vmatprep.subr.mxu0 0.0
    %1143 = vmatpush1.msra.mxu0 0.0
    %1144 = vmatprep.subr.mxu0 0.0
    %1145 = vmatpush1.msra.mxu0 0.0
    %1146 = vmatprep.subr.mxu0 0.0
    %1147 = vmatpush1.msra.mxu0 0.0
    %1148 = vmatprep.subr.mxu0 0.0
    %1149 = vmatpush1.msra.mxu0 0.0
    %1150 = vmatprep.mubr.f32.mxu0 0.0
    %1151 = vmatmul.mubr.f32.gmra.mrb[0].mxu0 %v1084
    %v1152 = vpop.f32.mrb[0].mxu0
    %v1153 = vadd.f32 0.0, %v1152
    %v1154 = vpop.f32.mrb[0].mxu0
    %1155 = vdwg.mxu0
    %v1156 = vadd.f32 %v1083, %v1153
    %v1157 = vmul.f32 %v1156, 0.5
    %v1158 = vtanh.pop %v1157
    %v1159 = vmul.f32 %v1158, 0.5
    %v1160 = vadd.f32 %v1159, 0.5
    %v1161 = vtanh.pop %v1156
    %v1162 = vmul.f32 %v1160, %v1070
    %1164 = vrot.lane.b32.xlu0 %v1161, 64
    %v1165 = vpop.permute.xlu0 %1164
    %v1167 = vmul.f32 %v1160, %v1165
    %1169 = vrot.lane.b32.xlu0 %v1167, 32
    %v1170 = vpop.permute.xlu0 %1169
    %v1172 = vadd.f32 %v1162, %v1170
    %v1173 = vtanh.pop %v1172
    %1175 = vrot.lane.b32.xlu0 %v1173, 64
    %v1176 = vpop.permute.xlu0 %1175
    %v1178 = vmul.f32 %v1160, %v1176
    %1180 = vrot.lane.b32.xlu0 %v1178, 32
    %v1181 = vpop.permute.xlu0 %1180
    %s1183 = scalar_lea.vmem %s4, 8
    %1184 = vst.msk [vmem:[%s1183] sm:$0x3] %vm775, %v1181
    %v1185 = vld [vmem:[%s512] sm:$0x3]
    %v1186 = vsel %vm54, %v1181, 0
    %1188 = vmatprep.subr.mxu0 0.0
    %1189 = vmatpush1.msra.mxu0 %v42
    %1190 = vmatprep.subr.mxu0 0.0
    %1191 = vmatpush1.msra.mxu0 %v43
    %1192 = vmatprep.subr.mxu0 0.0
    %1193 = vmatpush1.msra.mxu0 %v44
    %1194 = vmatprep.subr.mxu0 0.0
    %1195 = vmatpush1.msra.mxu0 %v45
    %1196 = vmatprep.subr.mxu0 0.0
    %1197 = vmatpush1.msra.mxu0 0.0
    %1198 = vmatprep.subr.mxu0 0.0
    %1199 = vmatpush1.msra.mxu0 0.0
    %1200 = vmatprep.subr.mxu0 0.0
    %1201 = vmatpush1.msra.mxu0 0.0
    %1202 = vmatprep.subr.mxu0 0.0
    %1203 = vmatpush1.msra.mxu0 0.0
    %1204 = vmatprep.subr.mxu0 0.0
    %1205 = vmatpush1.msra.mxu0 0.0
    %1206 = vmatprep.subr.mxu0 0.0
    %1207 = vmatpush1.msra.mxu0 0.0
    %1208 = vmatprep.subr.mxu0 0.0
    %1209 = vmatpush1.msra.mxu0 0.0
    %1210 = vmatprep.subr.mxu0 0.0
    %1211 = vmatpush1.msra.mxu0 0.0
    %1212 = vmatprep.subr.mxu0 0.0
    %1213 = vmatpush1.msra.mxu0 0.0
    %1214 = vmatprep.subr.mxu0 0.0
    %1215 = vmatpush1.msra.mxu0 0.0
    %1216 = vmatprep.subr.mxu0 0.0
    %1217 = vmatpush1.msra.mxu0 0.0
    %1218 = vmatprep.subr.mxu0 0.0
    %1219 = vmatpush1.msra.mxu0 0.0
    %1220 = vmatprep.subr.mxu0 0.0
    %1221 = vmatpush1.msra.mxu0 0.0
    %1222 = vmatprep.subr.mxu0 0.0
    %1223 = vmatpush1.msra.mxu0 0.0
    %1224 = vmatprep.subr.mxu0 0.0
    %1225 = vmatpush1.msra.mxu0 0.0
    %1226 = vmatprep.subr.mxu0 0.0
    %1227 = vmatpush1.msra.mxu0 0.0
    %1228 = vmatprep.subr.mxu0 0.0
    %1229 = vmatpush1.msra.mxu0 0.0
    %1230 = vmatprep.subr.mxu0 0.0
    %1231 = vmatpush1.msra.mxu0 0.0
    %1232 = vmatprep.subr.mxu0 0.0
    %1233 = vmatpush1.msra.mxu0 0.0
    %1234 = vmatprep.subr.mxu0 0.0
    %1235 = vmatpush1.msra.mxu0 0.0
    %1236 = vmatprep.subr.mxu0 0.0
    %1237 = vmatpush1.msra.mxu0 0.0
    %1238 = vmatprep.subr.mxu0 0.0
    %1239 = vmatpush1.msra.mxu0 0.0
    %1240 = vmatprep.subr.mxu0 0.0
    %1241 = vmatpush1.msra.mxu0 0.0
    %1242 = vmatprep.subr.mxu0 0.0
    %1243 = vmatpush1.msra.mxu0 0.0
    %1244 = vmatprep.subr.mxu0 0.0
    %1245 = vmatpush1.msra.mxu0 0.0
    %1246 = vmatprep.subr.mxu0 0.0
    %1247 = vmatpush1.msra.mxu0 0.0
    %1248 = vmatprep.subr.mxu0 0.0
    %1249 = vmatpush1.msra.mxu0 0.0
    %1250 = vmatprep.subr.mxu0 0.0
    %1251 = vmatpush1.msra.mxu0 0.0
    %1252 = vmatprep.mubr.f32.mxu0 0.0
    %1253 = vmatmul.mubr.f32.gmra.mrb[0].mxu0 %v1186
    %v1254 = vpop.f32.mrb[0].mxu0
    %v1255 = vadd.f32 0.0, %v1254
    %v1256 = vpop.f32.mrb[0].mxu0
    %1257 = vdwg.mxu0
    %v1258 = vadd.f32 %v1185, %v1255
    %v1259 = vmul.f32 %v1258, 0.5
    %v1260 = vtanh.pop %v1259
    %v1261 = vmul.f32 %v1260, 0.5
    %v1262 = vadd.f32 %v1261, 0.5
    %v1263 = vtanh.pop %v1258
    %v1264 = vmul.f32 %v1262, %v1172
    %1266 = vrot.lane.b32.xlu0 %v1263, 64
    %v1267 = vpop.permute.xlu0 %1266
    %v1269 = vmul.f32 %v1262, %v1267
    %1271 = vrot.lane.b32.xlu0 %v1269, 32
    %v1272 = vpop.permute.xlu0 %1271
    %v1274 = vadd.f32 %v1264, %v1272
    %v1275 = vtanh.pop %v1274
    %1277 = vrot.lane.b32.xlu0 %v1275, 64
    %v1278 = vpop.permute.xlu0 %1277
    %v1280 = vmul.f32 %v1262, %v1278
    %1282 = vrot.lane.b32.xlu0 %v1280, 32
    %v1283 = vpop.permute.xlu0 %1282
    %s1285 = scalar_lea.vmem %s4, 10
    %1286 = vst.msk [vmem:[%s1285] sm:$0x3] %vm775, %v1283
    %v1287 = vld [vmem:[%s589] sm:$0x3]
    %v1288 = vsel %vm54, %v1283, 0
    %1290 = vmatprep.subr.mxu0 0.0
    %1291 = vmatpush1.msra.mxu0 %v42
    %1292 = vmatprep.subr.mxu0 0.0
    %1293 = vmatpush1.msra.mxu0 %v43
    %1294 = vmatprep.subr.mxu0 0.0
    %1295 = vmatpush1.msra.mxu0 %v44
    %1296 = vmatprep.subr.mxu0 0.0
    %1297 = vmatpush1.msra.mxu0 %v45
    %1298 = vmatprep.subr.mxu0 0.0
    %1299 = vmatpush1.msra.mxu0 0.0
    %1300 = vmatprep.subr.mxu0 0.0
    %1301 = vmatpush1.msra.mxu0 0.0
    %1302 = vmatprep.subr.mxu0 0.0
    %1303 = vmatpush1.msra.mxu0 0.0
    %1304 = vmatprep.subr.mxu0 0.0
    %1305 = vmatpush1.msra.mxu0 0.0
    %1306 = vmatprep.subr.mxu0 0.0
    %1307 = vmatpush1.msra.mxu0 0.0
    %1308 = vmatprep.subr.mxu0 0.0
    %1309 = vmatpush1.msra.mxu0 0.0
    %1310 = vmatprep.subr.mxu0 0.0
    %1311 = vmatpush1.msra.mxu0 0.0
    %1312 = vmatprep.subr.mxu0 0.0
    %1313 = vmatpush1.msra.mxu0 0.0
    %1314 = vmatprep.subr.mxu0 0.0
    %1315 = vmatpush1.msra.mxu0 0.0
    %1316 = vmatprep.subr.mxu0 0.0
    %1317 = vmatpush1.msra.mxu0 0.0
    %1318 = vmatprep.subr.mxu0 0.0
    %1319 = vmatpush1.msra.mxu0 0.0
    %1320 = vmatprep.subr.mxu0 0.0
    %1321 = vmatpush1.msra.mxu0 0.0
    %1322 = vmatprep.subr.mxu0 0.0
    %1323 = vmatpush1.msra.mxu0 0.0
    %1324 = vmatprep.subr.mxu0 0.0
    %1325 = vmatpush1.msra.mxu0 0.0
    %1326 = vmatprep.subr.mxu0 0.0
    %1327 = vmatpush1.msra.mxu0 0.0
    %1328 = vmatprep.subr.mxu0 0.0
    %1329 = vmatpush1.msra.mxu0 0.0
    %1330 = vmatprep.subr.mxu0 0.0
    %1331 = vmatpush1.msra.mxu0 0.0
    %1332 = vmatprep.subr.mxu0 0.0
    %1333 = vmatpush1.msra.mxu0 0.0
    %1334 = vmatprep.subr.mxu0 0.0
    %1335 = vmatpush1.msra.mxu0 0.0
    %1336 = vmatprep.subr.mxu0 0.0
    %1337 = vmatpush1.msra.mxu0 0.0
    %1338 = vmatprep.subr.mxu0 0.0
    %1339 = vmatpush1.msra.mxu0 0.0
    %1340 = vmatprep.subr.mxu0 0.0
    %1341 = vmatpush1.msra.mxu0 0.0
    %1342 = vmatprep.subr.mxu0 0.0
    %1343 = vmatpush1.msra.mxu0 0.0
    %1344 = vmatprep.subr.mxu0 0.0
    %1345 = vmatpush1.msra.mxu0 0.0
    %1346 = vmatprep.subr.mxu0 0.0
    %1347 = vmatpush1.msra.mxu0 0.0
    %1348 = vmatprep.subr.mxu0 0.0
    %1349 = vmatpush1.msra.mxu0 0.0
    %1350 = vmatprep.subr.mxu0 0.0
    %1351 = vmatpush1.msra.mxu0 0.0
    %1352 = vmatprep.subr.mxu0 0.0
    %1353 = vmatpush1.msra.mxu0 0.0
    %1354 = vmatprep.mubr.f32.mxu0 0.0
    %1355 = vmatmul.mubr.f32.gmra.mrb[0].mxu0 %v1288
    %v1356 = vpop.f32.mrb[0].mxu0
    %v1357 = vadd.f32 0.0, %v1356
    %v1358 = vpop.f32.mrb[0].mxu0
    %1359 = vdwg.mxu0
    %v1360 = vadd.f32 %v1287, %v1357
    %v1361 = vmul.f32 %v1360, 0.5
    %v1362 = vtanh.pop %v1361
    %v1363 = vmul.f32 %v1362, 0.5
    %v1364 = vadd.f32 %v1363, 0.5
    %v1365 = vtanh.pop %v1360
    %v1366 = vmul.f32 %v1364, %v1274
    %1368 = vrot.lane.b32.xlu0 %v1365, 64
    %v1369 = vpop.permute.xlu0 %1368
    %v1371 = vmul.f32 %v1364, %v1369
    %1373 = vrot.lane.b32.xlu0 %v1371, 32
    %v1374 = vpop.permute.xlu0 %1373
    %v1376 = vadd.f32 %v1366, %v1374
    %v1377 = vtanh.pop %v1376
    %1379 = vrot.lane.b32.xlu0 %v1377, 64
    %v1380 = vpop.permute.xlu0 %1379
    %v1382 = vmul.f32 %v1364, %v1380
    %1384 = vrot.lane.b32.xlu0 %v1382, 32
    %v1385 = vpop.permute.xlu0 %1384
    %s1387 = scalar_lea.vmem %s4, 12
    %1388 = vst.msk [vmem:[%s1387] sm:$0x3] %vm775, %v1385
    %v1389 = vld [vmem:[%s666] sm:$0x3]
    %v1390 = vsel %vm54, %v1385, 0
    %1392 = vmatprep.subr.mxu0 0.0
    %1393 = vmatpush1.msra.mxu0 %v42
    %1394 = vmatprep.subr.mxu0 0.0
    %1395 = vmatpush1.msra.mxu0 %v43
    %1396 = vmatprep.subr.mxu0 0.0
    %1397 = vmatpush1.msra.mxu0 %v44
    %1398 = vmatprep.subr.mxu0 0.0
    %1399 = vmatpush1.msra.mxu0 %v45
    %1400 = vmatprep.subr.mxu0 0.0
    %1401 = vmatpush1.msra.mxu0 0.0
    %1402 = vmatprep.subr.mxu0 0.0
    %1403 = vmatpush1.msra.mxu0 0.0
    %1404 = vmatprep.subr.mxu0 0.0
    %1405 = vmatpush1.msra.mxu0 0.0
    %1406 = vmatprep.subr.mxu0 0.0
    %1407 = vmatpush1.msra.mxu0 0.0
    %1408 = vmatprep.subr.mxu0 0.0
    %1409 = vmatpush1.msra.mxu0 0.0
    %1410 = vmatprep.subr.mxu0 0.0
    %1411 = vmatpush1.msra.mxu0 0.0
    %1412 = vmatprep.subr.mxu0 0.0
    %1413 = vmatpush1.msra.mxu0 0.0
    %1414 = vmatprep.subr.mxu0 0.0
    %1415 = vmatpush1.msra.mxu0 0.0
    %1416 = vmatprep.subr.mxu0 0.0
    %1417 = vmatpush1.msra.mxu0 0.0
    %1418 = vmatprep.subr.mxu0 0.0
    %1419 = vmatpush1.msra.mxu0 0.0
    %1420 = vmatprep.subr.mxu0 0.0
    %1421 = vmatpush1.msra.mxu0 0.0
    %1422 = vmatprep.subr.mxu0 0.0
    %1423 = vmatpush1.msra.mxu0 0.0
    %1424 = vmatprep.subr.mxu0 0.0
    %1425 = vmatpush1.msra.mxu0 0.0
    %1426 = vmatprep.subr.mxu0 0.0
    %1427 = vmatpush1.msra.mxu0 0.0
    %1428 = vmatprep.subr.mxu0 0.0
    %1429 = vmatpush1.msra.mxu0 0.0
    %1430 = vmatprep.subr.mxu0 0.0
    %1431 = vmatpush1.msra.mxu0 0.0
    %1432 = vmatprep.subr.mxu0 0.0
    %1433 = vmatpush1.msra.mxu0 0.0
    %1434 = vmatprep.subr.mxu0 0.0
    %1435 = vmatpush1.msra.mxu0 0.0
    %1436 = vmatprep.subr.mxu0 0.0
    %1437 = vmatpush1.msra.mxu0 0.0
    %1438 = vmatprep.subr.mxu0 0.0
    %1439 = vmatpush1.msra.mxu0 0.0
    %1440 = vmatprep.subr.mxu0 0.0
    %1441 = vmatpush1.msra.mxu0 0.0
    %1442 = vmatprep.subr.mxu0 0.0
    %1443 = vmatpush1.msra.mxu0 0.0
    %1444 = vmatprep.subr.mxu0 0.0
    %1445 = vmatpush1.msra.mxu0 0.0
    %1446 = vmatprep.subr.mxu0 0.0
    %1447 = vmatpush1.msra.mxu0 0.0
    %1448 = vmatprep.subr.mxu0 0.0
    %1449 = vmatpush1.msra.mxu0 0.0
    %1450 = vmatprep.subr.mxu0 0.0
    %1451 = vmatpush1.msra.mxu0 0.0
    %1452 = vmatprep.subr.mxu0 0.0
    %1453 = vmatpush1.msra.mxu0 0.0
    %1454 = vmatprep.subr.mxu0 0.0
    %1455 = vmatpush1.msra.mxu0 0.0
    %1456 = vmatprep.mubr.f32.mxu0 0.0
    %1457 = vmatmul.mubr.f32.gmra.mrb[0].mxu0 %v1390
    %v1458 = vpop.f32.mrb[0].mxu0
    %v1459 = vadd.f32 0.0, %v1458
    %v1460 = vpop.f32.mrb[0].mxu0
    %1461 = vdwg.mxu0
    %v1462 = vadd.f32 %v1389, %v1459
    %v1463 = vmul.f32 %v1462, 0.5
    %v1464 = vtanh.pop %v1463
    %v1465 = vmul.f32 %v1464, 0.5
    %v1466 = vadd.f32 %v1465, 0.5
    %v1467 = vtanh.pop %v1462
    %v1468 = vmul.f32 %v1466, %v1376
    %1470 = vrot.lane.b32.xlu0 %v1467, 64
    %v1471 = vpop.permute.xlu0 %1470
    %v1473 = vmul.f32 %v1466, %v1471
    %1475 = vrot.lane.b32.xlu0 %v1473, 32
    %v1476 = vpop.permute.xlu0 %1475
    %v1478 = vadd.f32 %v1468, %v1476
    %v1479 = vtanh.pop %v1478
    %1481 = vrot.lane.b32.xlu0 %v1479, 64
    %v1482 = vpop.permute.xlu0 %1481
    %v1484 = vmul.f32 %v1466, %v1482
    %1486 = vrot.lane.b32.xlu0 %v1484, 32
    %v1487 = vpop.permute.xlu0 %1486
    %s1489 = scalar_lea.vmem %s4, 14
    %1490 = vst.msk [vmem:[%s1489] sm:$0x3] %vm775, %v1487
    %1491 = vst.msk [vmem:[#allocation2] sm:$0x3] %vm775, %v1487
    %1493 = vrot.lane.b32.xlu0 %v1478, 96
    %v1494 = vpop.permute.xlu0 %1493
    %1496 = vst.msk [vmem:[#allocation3] sm:$0x3] %vm775, %v1494
    // Predicated region
    $region26: #{lstm_classifier_forward.1} parent=1 // pred_check
      _
    $region27: #{lstm_classifier_forward.1} parent=1 // pred_check_branch
      %1498 = sbr.rel (0) target = $region29
    $region28: #{lstm_classifier_forward.1} parent=1 // pred_region
      _
    $region29: #{lstm_classifier_forward.1} parent=1 // pred_fallthru
      _
    // Predicated region
    $region30: #{lstm_classifier_forward.1} parent=1 // pred_check
      _
    $region31: #{lstm_classifier_forward.1} parent=1 // pred_check_branch
      %1500 = sbr.rel (0) target = $region33
    $region32: #{lstm_classifier_forward.1} parent=1 // pred_region
      _
    $region33: #{lstm_classifier_forward.1} parent=1 // pred_fallthru
      _
    %1501 = vsyncpa [#allocation6], 1

</llo_original>
